<compile_context>
chip_gen: v7x
topology: tpu7x:2x2x1
jax: 0.10.0
libtpu: 0.0.40
codegen_flags: <defaults>
</compile_context>

<pallas_src>
import math

import jax
import jax.numpy as jnp
import numpy as np
from jax.experimental import pallas as pl
from jax.experimental.pallas import tpu as pltpu


def _pick_row_tile(rows, lanes, itemsize, max_rows=512, max_tile_bytes=2 << 20):
    """Largest multiple-of-8 divisor of `rows` with one (tr, lanes) tile under
    `max_tile_bytes` and at most `max_rows` rows; falls back to a single block."""
    cap = min(rows, max_rows, max(8, max_tile_bytes // max(1, lanes * itemsize)))
    best = rows
    for tr in range(8, int(cap) + 1, 8):
        if rows % tr == 0:
            best = tr
    return best


def _make_kernel(B, C):
    """Fused CrossAttention forward.

    Ref layouts:
      cond_t_ref: (cond_dim, B)   cond, pre-transposed (tiny)
      wp_ref    : (C, cond_dim)   proj_cond weight (PyTorch (out, in) as-is)
      wf_t_ref  : (C, C)          folded Wo @ Wv
      cols_ref  : (C, 4)          columns [proj_b, ln_gamma, ln_beta, b_f]
      x_ref     : (TR, L)         native-layout row tile of x.reshape(B*C, H*W)
      o_ref     : (TR, L)         same tiling as x
      add_ref   : (B*C, 1) VMEM   per-slab-row addend att[b, c] (persistent scratch)
    """

    def kernel(cond_t_ref, wp_ref, wf_t_ref, cols_ref, x_ref, o_ref, add_ref):
        step = pl.program_id(0)
        tr = x_ref.shape[0]

        # ---- one-time cond -> att path (transposed: channels on sublanes) ----
        @pl.when(step == 0)
        def _():
            # proj_cond: (C, cond_dim) @ (cond_dim, B) + bias column
            c_proj_t = (jnp.dot(wp_ref[...], cond_t_ref[...],
                                preferred_element_type=jnp.float32)
                        + cols_ref[:, 0:1])
            # LayerNorm over channels (axis 0 = sublanes), eps = 1e-5, affine.
            mu = jnp.mean(c_proj_t, axis=0, keepdims=True)
            var = jnp.mean((c_proj_t - mu) ** 2, axis=0, keepdims=True)
            kv_t = ((c_proj_t - mu) * jax.lax.rsqrt(var + 1e-5)
                    * cols_ref[:, 1:2] + cols_ref[:, 2:3])
            # Single KV token => softmax == 1; folded value+output projection.
            att_t = (jnp.dot(wf_t_ref[...], kv_t,
                             preferred_element_type=jnp.float32)
                     + cols_ref[:, 3:4])                       # (C, B)
            # Scatter att[b, c] to slab row b*C + c.  One-time, O(B*C) work
            # (static unroll over the tiny batch dim, not over spatial).
            for b in range(B):
                add_ref[b * C:(b + 1) * C, :] = att_t[:, b:b + 1]

        # ---- streaming residual add in native layout (lane-broadcast) ----
        row0 = pl.multiple_of(step * tr, tr)
        add = add_ref[pl.ds(row0, tr), :]                      # (tr, 1) f32
        o_ref[...] = (x_ref[...] + add).astype(o_ref.dtype)

    return kernel


def cross_attention(x, cond, params, n_heads=4):
    """Pallas forward of the PyTorch CrossAttention module.

    out = x + broadcast_HW( (LN(cond @ Wp.T + bp) @ Wv.T + bv) @ Wo.T + bo )
    which is exactly the module forward (single KV token => softmax == 1).
    """
    del n_heads  # output is provably independent of the head count
    B, C, H, W = x.shape
    L = H * W
    cond_dim = cond.shape[-1]
    assert C % 8 == 0, "channels must be a multiple of 8 (sublane tiling)"

    rows = B * C
    itemsize = np.dtype(x.dtype).itemsize
    tr = _pick_row_tile(rows, L, itemsize)

    # Free row-major view of NCHW: no transpose, no copy.
    x_slab = x.reshape(rows, L)

    # Offline parameter folding (f32).  PyTorch weights are (out, in); the
    # transposed-compute formulation needs no weight transposes at all.
    f32 = jnp.float32
    wv = params["in_proj_w"][2 * C:3 * C].astype(f32)       # value chunk (C, C)
    bv = params["in_proj_b"][2 * C:3 * C].astype(f32)
    wo = params["out_proj_w"].astype(f32)
    wf_t = wo @ wv                                           # att^T = (Wo Wv) kv^T + b_f
    b_f = wo @ bv + params["out_proj_b"].astype(f32)
    wp = params["proj_w"].astype(f32)                        # (C, cond_dim)
    cols = jnp.stack([params["proj_b"].astype(f32),
                      params["ln_g"].astype(f32),
                      params["ln_b"].astype(f32), b_f], axis=1)   # (C, 4)
    cond_t = cond.astype(f32).T                              # (cond_dim, B), tiny

    const_bytes = 4 * (C * C + C * cond_dim + 4 * C + cond_dim * B)
    vmem_limit = int(4 * tr * L * itemsize          # in + out tiles, double-buffered
                     + 2 * const_bytes              # resident weights / cond
                     + rows * 128 * 4               # addend scratch (lane-padded)
                     + (8 << 20))                   # headroom
    cost = pl.CostEstimate(
        flops=int(2 * B * C * (cond_dim + C) + 10 * B * C + rows * L),
        transcendentals=int(B),
        bytes_accessed=int(2 * rows * L * itemsize + const_bytes))

    out_slab = pl.pallas_call(
        _make_kernel(B, C),
        out_shape=jax.ShapeDtypeStruct((rows, L), x.dtype),
        grid_spec=pltpu.PrefetchScalarGridSpec(
            num_scalar_prefetch=0,
            grid=(rows // tr,),
            in_specs=[
                pl.BlockSpec((cond_dim, B), lambda i: (0, 0)),   # cond^T (resident)
                pl.BlockSpec((C, cond_dim), lambda i: (0, 0)),   # Wp      (resident)
                pl.BlockSpec((C, C), lambda i: (0, 0)),          # Wo @ Wv (resident)
                pl.BlockSpec((C, 4), lambda i: (0, 0)),          # biases/gamma/beta
                pl.BlockSpec((tr, L), lambda i: (i, 0)),         # x tile (streamed)
            ],
            out_specs=pl.BlockSpec((tr, L), lambda i: (i, 0)),
            scratch_shapes=[pltpu.VMEM((rows, 1), jnp.float32)],
        ),
        compiler_params=pltpu.CompilerParams(
            dimension_semantics=("arbitrary",),
            vmem_limit_bytes=min(vmem_limit, 64 << 20)),
        cost_estimate=cost,
    )(cond_t, wp, wf_t, cols, x_slab)

    return out_slab.reshape(B, C, H, W)


def reference(x, cond, params, n_heads=4):
    """Pure-JAX reference matching the full PyTorch forward (no shortcuts)."""
    B, C, H, W = x.shape
    L = H * W
    xs = jnp.transpose(x.reshape(B, C, L), (0, 2, 1))            # (B, L, C)

    def ln(t):
        mu = t.mean(-1, keepdims=True)
        var = ((t - mu) ** 2).mean(-1, keepdims=True)
        return (t - mu) / jnp.sqrt(var + 1e-5) * params["ln_g"] + params["ln_b"]

    cproj = cond @ params["proj_w"].T + params["proj_b"]         # (B, C)
    q_in = ln(xs)
    kv_in = ln(cproj)[:, None, :]                                # (B, 1, C)

    wq, wk, wv = jnp.split(params["in_proj_w"], 3, axis=0)
    bq, bk, bv = jnp.split(params["in_proj_b"], 3)
    q = q_in @ wq.T + bq
    k = kv_in @ wk.T + bk
    v = kv_in @ wv.T + bv
    hd = C // n_heads
    qh = q.reshape(B, L, n_heads, hd).transpose(0, 2, 1, 3)
    kh = k.reshape(B, 1, n_heads, hd).transpose(0, 2, 1, 3)
    vh = v.reshape(B, 1, n_heads, hd).transpose(0, 2, 1, 3)
    scores = (qh @ jnp.swapaxes(kh, -1, -2)) / math.sqrt(hd)
    w = jax.nn.softmax(scores, axis=-1)
    ah = w @ vh
    att = ah.transpose(0, 2, 1, 3).reshape(B, L, C)
    att = att @ params["out_proj_w"].T + params["out_proj_b"]
    out = xs + att
    return jnp.transpose(out, (0, 2, 1)).reshape(B, C, H, W)


if __name__ == "__main__":
    # C=64, cond_dim=4, n_heads=4 are the module defaults; B=16 gives a
    # 1024-row slab -> a 2-step grid of 512-row lane-dense tiles (still tiny).
    B, C, H, W = 16, 64, 16, 16
    n_heads, cond_dim = 4, 4

    key = jax.random.PRNGKey(0)
    ks = jax.random.split(key, 10)
    x = jax.random.normal(ks[0], (B, C, H, W), jnp.float32)
    cond = jax.random.normal(ks[1], (B, cond_dim), jnp.float32)

    # Deterministic synthetic parameters (PyTorch weight conventions: (out, in)).
    params = {
        "proj_w": 0.1 * jax.random.normal(ks[2], (C, cond_dim), jnp.float32),
        "proj_b": 0.1 * jax.random.normal(ks[3], (C,), jnp.float32),
        "ln_g": 1.0 + 0.1 * jax.random.normal(ks[4], (C,), jnp.float32),
        "ln_b": 0.1 * jax.random.normal(ks[5], (C,), jnp.float32),
        "in_proj_w": 0.1 * jax.random.normal(ks[6], (3 * C, C), jnp.float32),
        "in_proj_b": 0.1 * jax.random.normal(ks[7], (3 * C,), jnp.float32),
        "out_proj_w": 0.1 * jax.random.normal(ks[8], (C, C), jnp.float32),
        "out_proj_b": 0.1 * jax.random.normal(ks[9], (C,), jnp.float32),
    }
    # TODO(synk): dropout (p=0.0 in the module) is a no-op and is not implemented.

    out = jax.block_until_ready(cross_attention(x, cond, params, n_heads=n_heads))
    ref = reference(x, cond, params, n_heads=n_heads)
    np.testing.assert_allclose(np.asarray(out), np.asarray(ref), rtol=1e-4, atol=1e-4)
    print("KERNEL_OK")
</pallas_src>

<mosaic_0001>
module attributes {stable_mosaic.version = 11 : i64} {
  func.func @kernel(%arg0: i32, %arg1: memref<4x16xf32, #tpu.memory_space<vmem>>, %arg2: memref<64x4xf32, #tpu.memory_space<vmem>>, %arg3: memref<64x64xf32, #tpu.memory_space<vmem>>, %arg4: memref<64x4xf32, #tpu.memory_space<vmem>>, %arg5: memref<512x256xf32, #tpu.memory_space<vmem>>, %arg6: memref<512x256xf32, #tpu.memory_space<vmem>>, %arg7: memref<1024x1xf32, #tpu.memory_space<vmem>>) attributes {dimension_semantics = [#tpu.dimension_semantics<arbitrary>], iteration_bounds = array<i64: 2>, scalar_prefetch = 0 : i64, scratch_operands = 1 : i64, tpu.core_type = #tpu.core_type<tc>, window_params = [{pipeline_mode = #tpu.pipeline_mode<synchronous>, transform_indices = @transform_0, window_bounds = array<i64: 4, 16>}, {pipeline_mode = #tpu.pipeline_mode<synchronous>, transform_indices = @transform_1, window_bounds = array<i64: 64, 4>}, {pipeline_mode = #tpu.pipeline_mode<synchronous>, transform_indices = @transform_2, window_bounds = array<i64: 64, 64>}, {pipeline_mode = #tpu.pipeline_mode<synchronous>, transform_indices = @transform_3, window_bounds = array<i64: 64, 4>}, {transform_indices = @transform_4, window_bounds = array<i64: 512, 256>}, {transform_indices = @transform_5, window_bounds = array<i64: 512, 256>}]} {
    %c0_i32 = arith.constant 0 : i32
    %0 = arith.cmpi eq, %arg0, %c0_i32 : i32
    %1 = arith.extui %0 : i1 to i32
    %c0_i32_0 = arith.constant 0 : i32
    %2 = arith.cmpi ne, %1, %c0_i32_0 : i32
    scf.if %2 {
      %c0_5 = arith.constant 0 : index
      %c0_6 = arith.constant 0 : index
      %11 = vector.load %arg2[%c0_5, %c0_6] : memref<64x4xf32, #tpu.memory_space<vmem>>, vector<64x4xf32>
      %c0_7 = arith.constant 0 : index
      %c0_8 = arith.constant 0 : index
      %12 = vector.load %arg1[%c0_7, %c0_8] : memref<4x16xf32, #tpu.memory_space<vmem>>, vector<4x16xf32>
      %cst = arith.constant dense<0.000000e+00> : vector<64x16xf32>
      %13 = tpu.matmul %11, %12, %cst {dimension_numbers = #tpu.dot_dimension_numbers<[1], [0], [0], [1], [0, 0, 1, 1], [], []>} : vector<64x4xf32>, vector<4x16xf32>, vector<64x16xf32> -> vector<64x16xf32>
      %c0_9 = arith.constant 0 : index
      %c0_10 = arith.constant 0 : index
      %14 = vector.load %arg4[%c0_9, %c0_10] : memref<64x4xf32, #tpu.memory_space<vmem>>, vector<64x1xf32>
      %15 = vector.broadcast %14 : vector<64x1xf32> to vector<64x16xf32>
      %16 = arith.addf %13, %15 : vector<64x16xf32>
      %cst_11 = arith.constant dense<0.000000e+00> : vector<16xf32>
      %17 = vector.multi_reduction <add>, %16, %cst_11 [0] : vector<64x16xf32> to vector<16xf32>
      %18 = vector.shape_cast %17 : vector<16xf32> to vector<1x16xf32>
      %cst_12 = arith.constant 6.400000e+01 : f32
      %19 = vector.broadcast %cst_12 : f32 to vector<1x16xf32>
      %20 = arith.divf %18, %19 : vector<1x16xf32>
      %21 = vector.broadcast %20 : vector<1x16xf32> to vector<64x16xf32>
      %22 = arith.subf %16, %21 : vector<64x16xf32>
      %23 = arith.mulf %22, %22 : vector<64x16xf32>
      %cst_13 = arith.constant dense<0.000000e+00> : vector<16xf32>
      %24 = vector.multi_reduction <add>, %23, %cst_13 [0] : vector<64x16xf32> to vector<16xf32>
      %25 = vector.shape_cast %24 : vector<16xf32> to vector<1x16xf32>
      %cst_14 = arith.constant 6.400000e+01 : f32
      %26 = vector.broadcast %cst_14 : f32 to vector<1x16xf32>
      %27 = arith.divf %25, %26 : vector<1x16xf32>
      %28 = vector.broadcast %20 : vector<1x16xf32> to vector<64x16xf32>
      %29 = arith.subf %16, %28 : vector<64x16xf32>
      %cst_15 = arith.constant 9.99999974E-6 : f32
      %30 = vector.broadcast %cst_15 : f32 to vector<1x16xf32>
      %31 = arith.addf %27, %30 : vector<1x16xf32>
      %32 = math.rsqrt %31 : vector<1x16xf32>
      %33 = vector.broadcast %32 : vector<1x16xf32> to vector<64x16xf32>
      %34 = arith.mulf %29, %33 : vector<64x16xf32>
      %c0_16 = arith.constant 0 : index
      %c1 = arith.constant 1 : index
      %35 = vector.load %arg4[%c0_16, %c1] : memref<64x4xf32, #tpu.memory_space<vmem>>, vector<64x1xf32>
      %36 = vector.broadcast %35 : vector<64x1xf32> to vector<64x16xf32>
      %37 = arith.mulf %34, %36 : vector<64x16xf32>
      %c0_17 = arith.constant 0 : index
      %c2 = arith.constant 2 : index
      %38 = vector.load %arg4[%c0_17, %c2] : memref<64x4xf32, #tpu.memory_space<vmem>>, vector<64x1xf32>
      %39 = vector.broadcast %38 : vector<64x1xf32> to vector<64x16xf32>
      %40 = arith.addf %37, %39 : vector<64x16xf32>
      %c0_18 = arith.constant 0 : index
      %c0_19 = arith.constant 0 : index
      %41 = vector.load %arg3[%c0_18, %c0_19] : memref<64x64xf32, #tpu.memory_space<vmem>>, vector<64x64xf32>
      %cst_20 = arith.constant dense<0.000000e+00> : vector<64x16xf32>
      %42 = tpu.matmul %41, %40, %cst_20 {dimension_numbers = #tpu.dot_dimension_numbers<[1], [0], [0], [1], [0, 0, 1, 1], [], []>} : vector<64x64xf32>, vector<64x16xf32>, vector<64x16xf32> -> vector<64x16xf32>
      %c0_21 = arith.constant 0 : index
      %c3 = arith.constant 3 : index
      %43 = vector.load %arg4[%c0_21, %c3] : memref<64x4xf32, #tpu.memory_space<vmem>>, vector<64x1xf32>
      %44 = vector.broadcast %43 : vector<64x1xf32> to vector<64x16xf32>
      %45 = arith.addf %42, %44 : vector<64x16xf32>
      %46 = vector.extract_strided_slice %45 {offsets = [0, 0], sizes = [64, 1], strides = [1, 1]} : vector<64x16xf32> to vector<64x1xf32>
      %c0_22 = arith.constant 0 : index
      %c0_23 = arith.constant 0 : index
      %47 = vector.load %arg7[%c0_22, %c0_23] : memref<1024x1xf32, #tpu.memory_space<vmem>>, vector<64x1xf32>
      tpu.vector_store %arg7[%c0_22, %c0_23], %46 {strides = array<i32>} : memref<1024x1xf32, #tpu.memory_space<vmem>>, vector<64x1xf32>,
      %48 = vector.extract_strided_slice %45 {offsets = [0, 1], sizes = [64, 1], strides = [1, 1]} : vector<64x16xf32> to vector<64x1xf32>
      %c64 = arith.constant 64 : index
      %c0_24 = arith.constant 0 : index
      %49 = vector.load %arg7[%c64, %c0_24] : memref<1024x1xf32, #tpu.memory_space<vmem>>, vector<64x1xf32>
      tpu.vector_store %arg7[%c64, %c0_24], %48 {strides = array<i32>} : memref<1024x1xf32, #tpu.memory_space<vmem>>, vector<64x1xf32>,
      %50 = vector.extract_strided_slice %45 {offsets = [0, 2], sizes = [64, 1], strides = [1, 1]} : vector<64x16xf32> to vector<64x1xf32>
      %c128 = arith.constant 128 : index
      %c0_25 = arith.constant 0 : index
      %51 = vector.load %arg7[%c128, %c0_25] : memref<1024x1xf32, #tpu.memory_space<vmem>>, vector<64x1xf32>
      tpu.vector_store %arg7[%c128, %c0_25], %50 {strides = array<i32>} : memref<1024x1xf32, #tpu.memory_space<vmem>>, vector<64x1xf32>,
      %52 = vector.extract_strided_slice %45 {offsets = [0, 3], sizes = [64, 1], strides = [1, 1]} : vector<64x16xf32> to vector<64x1xf32>
      %c192 = arith.constant 192 : index
      %c0_26 = arith.constant 0 : index
      %53 = vector.load %arg7[%c192, %c0_26] : memref<1024x1xf32, #tpu.memory_space<vmem>>, vector<64x1xf32>
      tpu.vector_store %arg7[%c192, %c0_26], %52 {strides = array<i32>} : memref<1024x1xf32, #tpu.memory_space<vmem>>, vector<64x1xf32>,
      %54 = vector.extract_strided_slice %45 {offsets = [0, 4], sizes = [64, 1], strides = [1, 1]} : vector<64x16xf32> to vector<64x1xf32>
      %c256 = arith.constant 256 : index
      %c0_27 = arith.constant 0 : index
      %55 = vector.load %arg7[%c256, %c0_27] : memref<1024x1xf32, #tpu.memory_space<vmem>>, vector<64x1xf32>
      tpu.vector_store %arg7[%c256, %c0_27], %54 {strides = array<i32>} : memref<1024x1xf32, #tpu.memory_space<vmem>>, vector<64x1xf32>,
      %56 = vector.extract_strided_slice %45 {offsets = [0, 5], sizes = [64, 1], strides = [1, 1]} : vector<64x16xf32> to vector<64x1xf32>
      %c320 = arith.constant 320 : index
      %c0_28 = arith.constant 0 : index
      %57 = vector.load %arg7[%c320, %c0_28] : memref<1024x1xf32, #tpu.memory_space<vmem>>, vector<64x1xf32>
      tpu.vector_store %arg7[%c320, %c0_28], %56 {strides = array<i32>} : memref<1024x1xf32, #tpu.memory_space<vmem>>, vector<64x1xf32>,
      %58 = vector.extract_strided_slice %45 {offsets = [0, 6], sizes = [64, 1], strides = [1, 1]} : vector<64x16xf32> to vector<64x1xf32>
      %c384 = arith.constant 384 : index
      %c0_29 = arith.constant 0 : index
      %59 = vector.load %arg7[%c384, %c0_29] : memref<1024x1xf32, #tpu.memory_space<vmem>>, vector<64x1xf32>
      tpu.vector_store %arg7[%c384, %c0_29], %58 {strides = array<i32>} : memref<1024x1xf32, #tpu.memory_space<vmem>>, vector<64x1xf32>,
      %60 = vector.extract_strided_slice %45 {offsets = [0, 7], sizes = [64, 1], strides = [1, 1]} : vector<64x16xf32> to vector<64x1xf32>
      %c448 = arith.constant 448 : index
      %c0_30 = arith.constant 0 : index
      %61 = vector.load %arg7[%c448, %c0_30] : memref<1024x1xf32, #tpu.memory_space<vmem>>, vector<64x1xf32>
      tpu.vector_store %arg7[%c448, %c0_30], %60 {strides = array<i32>} : memref<1024x1xf32, #tpu.memory_space<vmem>>, vector<64x1xf32>,
      %62 = vector.extract_strided_slice %45 {offsets = [0, 8], sizes = [64, 1], strides = [1, 1]} : vector<64x16xf32> to vector<64x1xf32>
      %c512 = arith.constant 512 : index
      %c0_31 = arith.constant 0 : index
      %63 = vector.load %arg7[%c512, %c0_31] : memref<1024x1xf32, #tpu.memory_space<vmem>>, vector<64x1xf32>
      tpu.vector_store %arg7[%c512, %c0_31], %62 {strides = array<i32>} : memref<1024x1xf32, #tpu.memory_space<vmem>>, vector<64x1xf32>,
      %64 = vector.extract_strided_slice %45 {offsets = [0, 9], sizes = [64, 1], strides = [1, 1]} : vector<64x16xf32> to vector<64x1xf32>
      %c576 = arith.constant 576 : index
      %c0_32 = arith.constant 0 : index
      %65 = vector.load %arg7[%c576, %c0_32] : memref<1024x1xf32, #tpu.memory_space<vmem>>, vector<64x1xf32>
      tpu.vector_store %arg7[%c576, %c0_32], %64 {strides = array<i32>} : memref<1024x1xf32, #tpu.memory_space<vmem>>, vector<64x1xf32>,
      %66 = vector.extract_strided_slice %45 {offsets = [0, 10], sizes = [64, 1], strides = [1, 1]} : vector<64x16xf32> to vector<64x1xf32>
      %c640 = arith.constant 640 : index
      %c0_33 = arith.constant 0 : index
      %67 = vector.load %arg7[%c640, %c0_33] : memref<1024x1xf32, #tpu.memory_space<vmem>>, vector<64x1xf32>
      tpu.vector_store %arg7[%c640, %c0_33], %66 {strides = array<i32>} : memref<1024x1xf32, #tpu.memory_space<vmem>>, vector<64x1xf32>,
      %68 = vector.extract_strided_slice %45 {offsets = [0, 11], sizes = [64, 1], strides = [1, 1]} : vector<64x16xf32> to vector<64x1xf32>
      %c704 = arith.constant 704 : index
      %c0_34 = arith.constant 0 : index
      %69 = vector.load %arg7[%c704, %c0_34] : memref<1024x1xf32, #tpu.memory_space<vmem>>, vector<64x1xf32>
      tpu.vector_store %arg7[%c704, %c0_34], %68 {strides = array<i32>} : memref<1024x1xf32, #tpu.memory_space<vmem>>, vector<64x1xf32>,
      %70 = vector.extract_strided_slice %45 {offsets = [0, 12], sizes = [64, 1], strides = [1, 1]} : vector<64x16xf32> to vector<64x1xf32>
      %c768 = arith.constant 768 : index
      %c0_35 = arith.constant 0 : index
      %71 = vector.load %arg7[%c768, %c0_35] : memref<1024x1xf32, #tpu.memory_space<vmem>>, vector<64x1xf32>
      tpu.vector_store %arg7[%c768, %c0_35], %70 {strides = array<i32>} : memref<1024x1xf32, #tpu.memory_space<vmem>>, vector<64x1xf32>,
      %72 = vector.extract_strided_slice %45 {offsets = [0, 13], sizes = [64, 1], strides = [1, 1]} : vector<64x16xf32> to vector<64x1xf32>
      %c832 = arith.constant 832 : index
      %c0_36 = arith.constant 0 : index
      %73 = vector.load %arg7[%c832, %c0_36] : memref<1024x1xf32, #tpu.memory_space<vmem>>, vector<64x1xf32>
      tpu.vector_store %arg7[%c832, %c0_36], %72 {strides = array<i32>} : memref<1024x1xf32, #tpu.memory_space<vmem>>, vector<64x1xf32>,
      %74 = vector.extract_strided_slice %45 {offsets = [0, 14], sizes = [64, 1], strides = [1, 1]} : vector<64x16xf32> to vector<64x1xf32>
      %c896 = arith.constant 896 : index
      %c0_37 = arith.constant 0 : index
      %75 = vector.load %arg7[%c896, %c0_37] : memref<1024x1xf32, #tpu.memory_space<vmem>>, vector<64x1xf32>
      tpu.vector_store %arg7[%c896, %c0_37], %74 {strides = array<i32>} : memref<1024x1xf32, #tpu.memory_space<vmem>>, vector<64x1xf32>,
      %76 = vector.extract_strided_slice %45 {offsets = [0, 15], sizes = [64, 1], strides = [1, 1]} : vector<64x16xf32> to vector<64x1xf32>
      %c960 = arith.constant 960 : index
      %c0_38 = arith.constant 0 : index
      %77 = vector.load %arg7[%c960, %c0_38] : memref<1024x1xf32, #tpu.memory_space<vmem>>, vector<64x1xf32>
      tpu.vector_store %arg7[%c960, %c0_38], %76 {strides = array<i32>} : memref<1024x1xf32, #tpu.memory_space<vmem>>, vector<64x1xf32>,
    } else {
    }
    %c512_i32 = arith.constant 512 : i32
    %3 = arith.muli %arg0, %c512_i32 : i32
    %4 = tpu.assume_multiple %3, 512 : i32
    %5 = arith.index_cast %4 : i32 to index
    %c0 = arith.constant 0 : index
    %6 = vector.load %arg7[%5, %c0] : memref<1024x1xf32, #tpu.memory_space<vmem>>, vector<512x1xf32>
    %c0_1 = arith.constant 0 : index
    %c0_2 = arith.constant 0 : index
    %7 = vector.load %arg5[%c0_1, %c0_2] : memref<512x256xf32, #tpu.memory_space<vmem>>, vector<512x256xf32>
    %8 = vector.broadcast %6 : vector<512x1xf32> to vector<512x256xf32>
    %9 = arith.addf %7, %8 : vector<512x256xf32>
    %c0_3 = arith.constant 0 : index
    %c0_4 = arith.constant 0 : index
    %10 = vector.load %arg6[%c0_3, %c0_4] : memref<512x256xf32, #tpu.memory_space<vmem>>, vector<512x256xf32>
    tpu.vector_store %arg6[%c0_3, %c0_4], %9 {strides = array<i32>} : memref<512x256xf32, #tpu.memory_space<vmem>>, vector<512x256xf32>,
    return
  }
  func.func @transform_0(%arg0: i32) -> (i32, i32) {
    %c0_i32 = arith.constant 0 : i32
    %c0_i32_0 = arith.constant 0 : i32
    %c0_i32_1 = arith.constant 0 : i32
    return %c0_i32, %c0_i32_0 : i32, i32
  }
  func.func @transform_1(%arg0: i32) -> (i32, i32) {
    %c0_i32 = arith.constant 0 : i32
    %c0_i32_0 = arith.constant 0 : i32
    %c0_i32_1 = arith.constant 0 : i32
    return %c0_i32, %c0_i32_0 : i32, i32
  }
  func.func @transform_2(%arg0: i32) -> (i32, i32) {
    %c0_i32 = arith.constant 0 : i32
    %c0_i32_0 = arith.constant 0 : i32
    %c0_i32_1 = arith.constant 0 : i32
    return %c0_i32, %c0_i32_0 : i32, i32
  }
  func.func @transform_3(%arg0: i32) -> (i32, i32) {
    %c0_i32 = arith.constant 0 : i32
    %c0_i32_0 = arith.constant 0 : i32
    %c0_i32_1 = arith.constant 0 : i32
    return %c0_i32, %c0_i32_0 : i32, i32
  }
  func.func @transform_4(%arg0: i32) -> (i32, i32) {
    %c0_i32 = arith.constant 0 : i32
    %c0_i32_0 = arith.constant 0 : i32
    return %arg0, %c0_i32 : i32, i32
  }
  func.func @transform_5(%arg0: i32) -> (i32, i32) {
    %c0_i32 = arith.constant 0 : i32
    %c0_i32_0 = arith.constant 0 : i32
    return %arg0, %c0_i32 : i32, i32
  }
}

</mosaic_0001>

<llo_original>
// kernel: tpu_custom_call.1
$region0: #{tpu_custom_call.1}
  #allocation0 [shape = 'u32[]', space=smem, size = 0x4, offset = 0x4, fixed_abs, tag = 'smem constant byte address 0x4 - core index']
  #allocation1 [shape = 'u32[144,128]{1,0:T(1,128)}', space=vmem, size = 0x12000, scoped, tag = 'internal scratch']
  #allocation2 [shape = 'f32[1024,1]{1,0:T(8,128)}', space=vmem, size = 0x80000, scoped, tag = 'scratch operand']
  %s0 = inlined_call_operand.vmem [shape: f32[4,16], index: 0, kind: input, shape index: {}]
  %s1 = inlined_call_operand.vmem [shape: f32[64,4], index: 1, kind: input, shape index: {}]
  %s2 = inlined_call_operand.vmem [shape: f32[64,64], index: 2, kind: input, shape index: {}]
  %s3 = inlined_call_operand.vmem [shape: f32[64,4], index: 3, kind: input, shape index: {}]
  %s4 = inlined_call_operand.hbm [shape: f32[1024,256], index: 4, kind: input, shape index: {}]
  %s5 = inlined_call_operand.hbm [shape: f32[1024,256], index: 5, kind: output, shape index: {}]
  %s6 = sld [smem:[#allocation0]]
  $region61: #{tpu_custom_call.1} parent=0
    _
  %s8 = ssub.s32 1, %s6
  %s9 = scalar_select 0, %s8, %s6
  $region1: #{tpu_custom_call.1} parent=0
    #allocation3 [shape = 'u8[1048576]{0}', space=vmem, size = 0x100000, scoped, tag = 'input window, operand 4']
    #allocation4 [shape = 's32[2]{0}', space=sflag, size = 0x8, scoped, tag = 'scoped memory for tpu_custom_call.1']
    #allocation5 [shape = 's32[2]{0}', space=sflag, size = 0x8, scoped, tag = 'scoped memory for tpu_custom_call.1']
    #allocation6 [shape = 'u8[1048576]{0}', space=vmem, size = 0x100000, scoped, tag = 'output window, operand 0']
    %10 = vsyncpa [#allocation4], 0
    %s11 = scalar_lea.sflag [#allocation4], 1
    %12 = vsyncpa %s11, 0
    %13 = vsyncpa [#allocation5], 0
    %s14 = scalar_lea.sflag [#allocation5], 1
    %15 = vsyncpa %s14, 0
    loop: start=0, step=1, limit=4
    $region2: #{tpu_custom_call.1} parent=1 // loop_pre_header
      _
    $region3: #{tpu_custom_call.1} parent=1 // loop_header
      %s17 = sphi 0, %s21
      %p18 = scmp.ge.s32.totalorder %s17, 4
      %s25 = sphi 0, %s25
      %s27 = sphi 0, %s25
      %s28 = sphi 0, %s27
      %s42 = sphi 0, %s28
      %s46 = sphi 0, %s46
      %s48 = sphi 0, %s46
      %s49 = sphi 0, %s48
      %s63 = sphi 0, %s49
      %s67 = sphi 0, %s67
      %s69 = sphi 0, %s67
      %s70 = sphi 0, %s69
      %s84 = sphi 0, %s70
      %s88 = sphi 0, %s88
      %s90 = sphi 0, %s88
      %s91 = sphi 0, %s90
      %s105 = sphi 0, %s91
      %s111 = sphi 0, %s113
      %s114 = sphi 0, %s111
      %s115 = sphi 0, %s114
      %s131 = sphi 0, %s115
      %s137 = sphi 0, %s139
      %s140 = sphi 0, %s137
      %s141 = sphi 0, %s140
      %s157 = sphi 0, %s141
    $region4: #{tpu_custom_call.1} parent=1 // loop_header_branch
      %20 = sbr.rel (%p18) target = $region8
    $region5: #{tpu_custom_call.1} parent=1 // loop_body
      %s22 = ssub.s32 %s17, 1
      %s23 = ssub.s32 %s17, 2
      %s24 = sadd.s32 %s17, 1
      %s26 = sadd.s32 %s25, 1
      %p29 = scmp.eq.s32.totalorder %s17, 1
      %p30 = scmp.ne.s32.totalorder %s25, %s27
      %p31 = scmp.eq.s32.totalorder %s17, 0
      %p32 = por %p30, %p31
      %p33 = scmp.ne.s32.totalorder %s25, %s27
      %p34 = scmp.eq.s32.totalorder %s22, 1
      %p35 = por %p33, %p34
      %p36 = scmp.ne.s32.totalorder %s27, %s28
      %p37 = scmp.eq.s32.totalorder %s22, 0
      %p38 = por %p36, %p37
      %p39 = scmp.ne.s32.totalorder %s27, %s28
      %p40 = scmp.eq.s32.totalorder %s23, 1
      %p41 = por %p39, %p40
      %p43 = scmp.ne.s32.totalorder %s28, %s42
      %p44 = scmp.eq.s32.totalorder %s23, 0
      %p45 = por %p43, %p44
      %s47 = sadd.s32 %s46, 1
      %p50 = scmp.eq.s32.totalorder %s17, 1
      %p51 = scmp.ne.s32.totalorder %s46, %s48
      %p52 = scmp.eq.s32.totalorder %s17, 0
      %p53 = por %p51, %p52
      %p54 = scmp.ne.s32.totalorder %s46, %s48
      %p55 = scmp.eq.s32.totalorder %s22, 1
      %p56 = por %p54, %p55
      %p57 = scmp.ne.s32.totalorder %s48, %s49
      %p58 = scmp.eq.s32.totalorder %s22, 0
      %p59 = por %p57, %p58
      %p60 = scmp.ne.s32.totalorder %s48, %s49
      %p61 = scmp.eq.s32.totalorder %s23, 1
      %p62 = por %p60, %p61
      %p64 = scmp.ne.s32.totalorder %s49, %s63
      %p65 = scmp.eq.s32.totalorder %s23, 0
      %p66 = por %p64, %p65
      %s68 = sadd.s32 %s67, 1
      %p71 = scmp.eq.s32.totalorder %s17, 1
      %p72 = scmp.ne.s32.totalorder %s67, %s69
      %p73 = scmp.eq.s32.totalorder %s17, 0
      %p74 = por %p72, %p73
      %p75 = scmp.ne.s32.totalorder %s67, %s69
      %p76 = scmp.eq.s32.totalorder %s22, 1
      %p77 = por %p75, %p76
      %p78 = scmp.ne.s32.totalorder %s69, %s70
      %p79 = scmp.eq.s32.totalorder %s22, 0
      %p80 = por %p78, %p79
      %p81 = scmp.ne.s32.totalorder %s69, %s70
      %p82 = scmp.eq.s32.totalorder %s23, 1
      %p83 = por %p81, %p82
      %p85 = scmp.ne.s32.totalorder %s70, %s84
      %p86 = scmp.eq.s32.totalorder %s23, 0
      %p87 = por %p85, %p86
      %s89 = sadd.s32 %s88, 1
      %p92 = scmp.eq.s32.totalorder %s17, 1
      %p93 = scmp.ne.s32.totalorder %s88, %s90
      %p94 = scmp.eq.s32.totalorder %s17, 0
      %p95 = por %p93, %p94
      %p96 = scmp.ne.s32.totalorder %s88, %s90
      %p97 = scmp.eq.s32.totalorder %s22, 1
      %p98 = por %p96, %p97
      %p99 = scmp.ne.s32.totalorder %s90, %s91
      %p100 = scmp.eq.s32.totalorder %s22, 0
      %p101 = por %p99, %p100
      %p102 = scmp.ne.s32.totalorder %s90, %s91
      %p103 = scmp.eq.s32.totalorder %s23, 1
      %p104 = por %p102, %p103
      %p106 = scmp.ne.s32.totalorder %s91, %s105
      %p107 = scmp.eq.s32.totalorder %s23, 0
      %p108 = por %p106, %p107
      %s109 = ssub.s32 %s17, %s24
      %p110 = scmp.eq.s32.totalorder %s109, 0
      %s112 = sadd.s32 %s111, 1
      %s113 = scalar_select %p110, %s111, %s112
      %p116 = pneg %p110
      %p117 = scmp.eq.s32.totalorder %s17, 1
      %p118 = por %p116, %p117
      %p119 = scmp.ne.s32.totalorder %s111, %s114
      %p120 = scmp.eq.s32.totalorder %s17, 0
      %p121 = por %p119, %p120
      %p122 = scmp.ne.s32.totalorder %s111, %s114
      %p123 = scmp.eq.s32.totalorder %s22, 1
      %p124 = por %p122, %p123
      %p125 = scmp.ne.s32.totalorder %s114, %s115
      %p126 = scmp.eq.s32.totalorder %s22, 0
      %p127 = por %p125, %p126
      %p128 = scmp.ne.s32.totalorder %s114, %s115
      %p129 = scmp.eq.s32.totalorder %s23, 1
      %p130 = por %p128, %p129
      %p132 = scmp.ne.s32.totalorder %s115, %s131
      %p133 = scmp.eq.s32.totalorder %s23, 0
      %p134 = por %p132, %p133
      %s135 = ssub.s32 %s17, %s24
      %p136 = scmp.eq.s32.totalorder %s135, 0
      %s138 = sadd.s32 %s137, 1
      %s139 = scalar_select %p136, %s137, %s138
      %p142 = pneg %p136
      %p143 = scmp.eq.s32.totalorder %s17, 1
      %p144 = por %p142, %p143
      %p145 = scmp.ne.s32.totalorder %s137, %s140
      %p146 = scmp.eq.s32.totalorder %s17, 0
      %p147 = por %p145, %p146
      %p148 = scmp.ne.s32.totalorder %s137, %s140
      %p149 = scmp.eq.s32.totalorder %s22, 1
      %p150 = por %p148, %p149
      %p151 = scmp.ne.s32.totalorder %s140, %s141
      %p152 = scmp.eq.s32.totalorder %s22, 0
      %p153 = por %p151, %p152
      %p154 = scmp.ne.s32.totalorder %s140, %s141
      %p155 = scmp.eq.s32.totalorder %s23, 1
      %p156 = por %p154, %p155
      %p158 = scmp.ne.s32.totalorder %s141, %s157
      %p159 = scmp.eq.s32.totalorder %s23, 0
      %p160 = por %p158, %p159
      %p161 = scmp.le.s32.totalorder 1, %s17
      %p162 = scmp.lt.s32.totalorder %s17, 3
      %p163 = pnand %p161, %p162
      %p164 = pneg %p163
      // Predicated region
      $region9: #{tpu_custom_call.1} parent=5 // pred_check
        _
      $region10: #{tpu_custom_call.1} parent=5 // pred_check_branch
        %166 = sbr.rel (%p163) target = $region12
      $region11: #{tpu_custom_call.1} parent=5 // pred_region
        %s167 = ssub.s32 %s17, 1
        // Predicated region
        $region13: #{tpu_custom_call.1} parent=11 // pred_check
          %p168 = pneg %p38
        $region14: #{tpu_custom_call.1} parent=11 // pred_check_branch
          %170 = sbr.rel (%p168) target = $region16
        $region15: #{tpu_custom_call.1} parent=11 // pred_region
          _
        $region16: #{tpu_custom_call.1} parent=11 // pred_fallthru
          _
        // Predicated region
        $region17: #{tpu_custom_call.1} parent=11 // pred_check
          %p171 = pneg %p59
        $region18: #{tpu_custom_call.1} parent=11 // pred_check_branch
          %173 = sbr.rel (%p171) target = $region20
        $region19: #{tpu_custom_call.1} parent=11 // pred_region
          _
        $region20: #{tpu_custom_call.1} parent=11 // pred_fallthru
          _
        // Predicated region
        $region21: #{tpu_custom_call.1} parent=11 // pred_check
          %p174 = pneg %p80
        $region22: #{tpu_custom_call.1} parent=11 // pred_check_branch
          %176 = sbr.rel (%p174) target = $region24
        $region23: #{tpu_custom_call.1} parent=11 // pred_region
          _
        $region24: #{tpu_custom_call.1} parent=11 // pred_fallthru
          _
        // Predicated region
        $region25: #{tpu_custom_call.1} parent=11 // pred_check
          %p177 = pneg %p101
        $region26: #{tpu_custom_call.1} parent=11 // pred_check_branch
          %179 = sbr.rel (%p177) target = $region28
        $region27: #{tpu_custom_call.1} parent=11 // pred_region
          _
        $region28: #{tpu_custom_call.1} parent=11 // pred_fallthru
          _
      $region12: #{tpu_custom_call.1} parent=5 // pred_fallthru
        _
      %p180 = scmp.lt.s32.totalorder %s17, 2
      // Predicated region
      $region29: #{tpu_custom_call.1} parent=5 // pred_check
        %p181 = pneg %p180
      $region30: #{tpu_custom_call.1} parent=5 // pred_check_branch
        %183 = sbr.rel (%p181) target = $region32
      $region31: #{tpu_custom_call.1} parent=5 // pred_region
        // Predicated region
        $region33: #{tpu_custom_call.1} parent=31 // pred_check
          %p184 = pneg %p121
        $region34: #{tpu_custom_call.1} parent=31 // pred_check_branch
          %186 = sbr.rel (%p184) target = $region36
        $region35: #{tpu_custom_call.1} parent=31 // pred_region
          %s187 = sand.u32 %s111, 1
          %s188 = scalar_lea.sflag [#allocation4], %s187
          %s189 = sand.u32 %s111, 1
          %s190 = smul.addr %s189, 1024
          %s191 = scalar_lea.vmem [#allocation3], %s190
          %s192 = smul.u32 64, %s17
          %s194 = ssub.s32 16384, 16384
          %195 = vsyncadd %s188, %s194
          %s196 = smul.addr %s192, 2
          %s197 = smul.addr %s196, 128
          %s198 = scalar_lea.hbm %s4, %s197
          %s199 = sshll.u32 %s191, 4
          %s200 = int_to_ptr.vmem [resolvable:$true] %s199
          %205 = dma.hbm_to_vmem [thread:$0]  %s198, 16384, %s200, %s188, 256, 256, 16
        $region36: #{tpu_custom_call.1} parent=31 // pred_fallthru
          _
      $region32: #{tpu_custom_call.1} parent=5 // pred_fallthru
        _
      %p206 = scmp.le.s32.totalorder 1, %s17
      %p207 = scmp.lt.s32.totalorder %s17, 3
      %p208 = pnand %p206, %p207
      %p209 = pneg %p208
      // Predicated region
      $region37: #{tpu_custom_call.1} parent=5 // pred_check
        _
      $region38: #{tpu_custom_call.1} parent=5 // pred_check_branch
        %211 = sbr.rel (%p208) target = $region40
      $region39: #{tpu_custom_call.1} parent=5 // pred_region
        %s212 = ssub.s32 %s17, 1
        %s213 = sand.u32 %s114, 1
        %s214 = scalar_lea.sflag [#allocation4], %s213
        %s215 = sand.u32 %s114, 1
        %s216 = smul.addr %s215, 1024
        %s217 = scalar_lea.vmem [#allocation3], %s216
        // Predicated region
        $region41: #{tpu_custom_call.1} parent=39 // pred_check
          %p218 = pneg %p127
        $region42: #{tpu_custom_call.1} parent=39 // pred_check_branch
          %220 = sbr.rel (%p218) target = $region44
        $region43: #{tpu_custom_call.1} parent=39 // pred_region
          %221 = dma.done %s214, 16384
        $region44: #{tpu_custom_call.1} parent=39 // pred_fallthru
          _
        %p222 = pneg %p38
        %p223 = pneg %p35
        %p224 = pneg %p59
        %p225 = pneg %p56
        %p226 = pneg %p80
        %p227 = pneg %p77
        %p228 = pneg %p101
        %p229 = pneg %p98
        %s230 = sand.u32 %s114, 1
        %s231 = scalar_lea.sflag [#allocation4], %s230
        %s232 = sand.u32 %s114, 1
        %s233 = smul.addr %s232, 1024
        %s234 = scalar_lea.vmem [#allocation3], %s233
        %p235 = pneg %p127
        %p236 = pneg %p124
        %p237 = pneg %p153
        %p238 = pneg %p150
        %s239 = sand.u32 %s140, 1
        %s240 = scalar_lea.sflag [#allocation5], %s239
        %s241 = sand.u32 %s140, 1
        %s242 = smul.addr %s241, 1024
        %s243 = scalar_lea.vmem [#allocation6], %s242
        %s244 = smul.u32 64, %s22
        %s245 = smul.u32 64, %s22
        %p246 = scmp.eq.s32.totalorder %s22, 0
        // Predicated region
        $region45: #{tpu_custom_call.1} parent=39 // pred_check
          %p247 = pneg %p246
        $region46: #{tpu_custom_call.1} parent=39 // pred_check_branch
          %249 = sbr.rel (%p247) target = $region48
        $region47: #{tpu_custom_call.1} parent=39 // pred_region
          %v250 = vld [vmem:[%s1] sm:$0xff]
          %v251 = vld [vmem:[%s1 + $0x8] sm:$0xff]
          %v252 = vld [vmem:[%s1 + $0x10] sm:$0xff]
          %v253 = vld [vmem:[%s1 + $0x18] sm:$0xff]
          %v254 = vld [vmem:[%s1 + $0x20] sm:$0xff]
          %v255 = vld [vmem:[%s1 + $0x28] sm:$0xff]
          %v256 = vld [vmem:[%s1 + $0x30] sm:$0xff]
          %v257 = vld [vmem:[%s1 + $0x38] sm:$0xff]
          %v258 = vld [vmem:[%s0] sm:$0xf]
          %v259 = vld [vmem:[%s3] sm:$0xff]
          %v260 = vld [vmem:[%s3 + $0x8] sm:$0xff]
          %v261 = vld [vmem:[%s3 + $0x10] sm:$0xff]
          %v262 = vld [vmem:[%s3 + $0x18] sm:$0xff]
          %v263 = vld [vmem:[%s3 + $0x20] sm:$0xff]
          %v264 = vld [vmem:[%s3 + $0x28] sm:$0xff]
          %v265 = vld [vmem:[%s3 + $0x30] sm:$0xff]
          %v266 = vld [vmem:[%s3 + $0x38] sm:$0xff]
          %268 = vset.pattern.permute.xlu0 0
          %269 = vperm.xlu0 %268, %v259
          %v270 = vpop.permute.xlu0 %269
          %273 = vset.pattern.permute.xlu0 0
          %274 = vperm.xlu0 %273, %v260
          %v275 = vpop.permute.xlu0 %274
          %278 = vset.pattern.permute.xlu0 0
          %279 = vperm.xlu0 %278, %v261
          %v280 = vpop.permute.xlu0 %279
          %283 = vset.pattern.permute.xlu0 0
          %284 = vperm.xlu0 %283, %v262
          %v285 = vpop.permute.xlu0 %284
          %288 = vset.pattern.permute.xlu0 0
          %289 = vperm.xlu0 %288, %v263
          %v290 = vpop.permute.xlu0 %289
          %293 = vset.pattern.permute.xlu0 0
          %294 = vperm.xlu0 %293, %v264
          %v295 = vpop.permute.xlu0 %294
          %298 = vset.pattern.permute.xlu0 0
          %299 = vperm.xlu0 %298, %v265
          %v300 = vpop.permute.xlu0 %299
          %303 = vset.pattern.permute.xlu0 0
          %304 = vperm.xlu0 %303, %v266
          %v305 = vpop.permute.xlu0 %304
          %vm307 = vcmask 31744
          %v309 = vsel %vm307, %v250, 0
          %v312 = vsel %vm307, %v251, 0
          %v315 = vsel %vm307, %v252, 0
          %v318 = vsel %vm307, %v253, 0
          %v321 = vsel %vm307, %v254, 0
          %v324 = vsel %vm307, %v255, 0
          %v327 = vsel %vm307, %v256, 0
          %v330 = vsel %vm307, %v257, 0
          %vm332 = vcmask 1043456
          %v334 = vsel %vm332, %v258, 0
          %336 = vmatprep.subr.mxu0 0.0
          %337 = vmatpush1.msra.mxu0 %v334
          %338 = vmatprep.subr.mxu0 0.0
          %339 = vmatpush1.msra.mxu0 0.0
          %340 = vmatprep.subr.mxu0 0.0
          %341 = vmatpush1.msra.mxu0 0.0
          %342 = vmatprep.subr.mxu0 0.0
          %343 = vmatpush1.msra.mxu0 0.0
          %344 = vmatprep.subr.mxu0 0.0
          %345 = vmatpush1.msra.mxu0 0.0
          %346 = vmatprep.subr.mxu0 0.0
          %347 = vmatpush1.msra.mxu0 0.0
          %348 = vmatprep.subr.mxu0 0.0
          %349 = vmatpush1.msra.mxu0 0.0
          %350 = vmatprep.subr.mxu0 0.0
          %351 = vmatpush1.msra.mxu0 0.0
          %352 = vmatprep.subr.mxu0 0.0
          %353 = vmatpush1.msra.mxu0 0.0
          %354 = vmatprep.subr.mxu0 0.0
          %355 = vmatpush1.msra.mxu0 0.0
          %356 = vmatprep.subr.mxu0 0.0
          %357 = vmatpush1.msra.mxu0 0.0
          %358 = vmatprep.subr.mxu0 0.0
          %359 = vmatpush1.msra.mxu0 0.0
          %360 = vmatprep.subr.mxu0 0.0
          %361 = vmatpush1.msra.mxu0 0.0
          %362 = vmatprep.subr.mxu0 0.0
          %363 = vmatpush1.msra.mxu0 0.0
          %364 = vmatprep.subr.mxu0 0.0
          %365 = vmatpush1.msra.mxu0 0.0
          %366 = vmatprep.subr.mxu0 0.0
          %367 = vmatpush1.msra.mxu0 0.0
          %368 = vmatprep.subr.mxu0 0.0
          %369 = vmatpush1.msra.mxu0 0.0
          %370 = vmatprep.subr.mxu0 0.0
          %371 = vmatpush1.msra.mxu0 0.0
          %372 = vmatprep.subr.mxu0 0.0
          %373 = vmatpush1.msra.mxu0 0.0
          %374 = vmatprep.subr.mxu0 0.0
          %375 = vmatpush1.msra.mxu0 0.0
          %376 = vmatprep.subr.mxu0 0.0
          %377 = vmatpush1.msra.mxu0 0.0
          %378 = vmatprep.subr.mxu0 0.0
          %379 = vmatpush1.msra.mxu0 0.0
          %380 = vmatprep.subr.mxu0 0.0
          %381 = vmatpush1.msra.mxu0 0.0
          %382 = vmatprep.subr.mxu0 0.0
          %383 = vmatpush1.msra.mxu0 0.0
          %384 = vmatprep.subr.mxu0 0.0
          %385 = vmatpush1.msra.mxu0 0.0
          %386 = vmatprep.subr.mxu0 0.0
          %387 = vmatpush1.msra.mxu0 0.0
          %388 = vmatprep.subr.mxu0 0.0
          %389 = vmatpush1.msra.mxu0 0.0
          %390 = vmatprep.subr.mxu0 0.0
          %391 = vmatpush1.msra.mxu0 0.0
          %392 = vmatprep.subr.mxu0 0.0
          %393 = vmatpush1.msra.mxu0 0.0
          %394 = vmatprep.subr.mxu0 0.0
          %395 = vmatpush1.msra.mxu0 0.0
          %396 = vmatprep.subr.mxu0 0.0
          %397 = vmatpush1.msra.mxu0 0.0
          %398 = vmatprep.subr.mxu0 0.0
          %399 = vmatpush1.msra.mxu0 0.0
          %400 = vmatprep.mubr.f32.mxu0 0.0
          %401 = vmatmul.mubr.f32.gmra.mrb[0].mxu0 %v309
          %v402 = vpop.f32.mrb[0].mxu0
          %v403 = vadd.f32 %v270, %v402
          %v404 = vpop.f32.mrb[0].mxu0
          %405 = vmatprep.mubr.f32.mxu0 0.0
          %406 = vmatmul.mubr.f32.gmra.mrb[0].mxu0 %v312
          %v407 = vpop.f32.mrb[0].mxu0
          %v408 = vadd.f32 %v275, %v407
          %v409 = vpop.f32.mrb[0].mxu0
          %410 = vmatprep.mubr.f32.mxu0 0.0
          %411 = vmatmul.mubr.f32.gmra.mrb[0].mxu0 %v315
          %v412 = vpop.f32.mrb[0].mxu0
          %v413 = vadd.f32 %v280, %v412
          %v414 = vpop.f32.mrb[0].mxu0
          %415 = vmatprep.mubr.f32.mxu0 0.0
          %416 = vmatmul.mubr.f32.gmra.mrb[0].mxu0 %v318
          %v417 = vpop.f32.mrb[0].mxu0
          %v418 = vadd.f32 %v285, %v417
          %v419 = vpop.f32.mrb[0].mxu0
          %420 = vmatprep.mubr.f32.mxu0 0.0
          %421 = vmatmul.mubr.f32.gmra.mrb[0].mxu0 %v321
          %v422 = vpop.f32.mrb[0].mxu0
          %v423 = vadd.f32 %v290, %v422
          %v424 = vpop.f32.mrb[0].mxu0
          %425 = vmatprep.mubr.f32.mxu0 0.0
          %426 = vmatmul.mubr.f32.gmra.mrb[0].mxu0 %v324
          %v427 = vpop.f32.mrb[0].mxu0
          %v428 = vadd.f32 %v295, %v427
          %v429 = vpop.f32.mrb[0].mxu0
          %430 = vmatprep.mubr.f32.mxu0 0.0
          %431 = vmatmul.mubr.f32.gmra.mrb[0].mxu0 %v327
          %v432 = vpop.f32.mrb[0].mxu0
          %v433 = vadd.f32 %v300, %v432
          %v434 = vpop.f32.mrb[0].mxu0
          %435 = vmatprep.mubr.f32.mxu0 0.0
          %436 = vmatmul.mubr.f32.gmra.mrb[0].mxu0 %v330
          %v437 = vpop.f32.mrb[0].mxu0
          %v438 = vadd.f32 %v305, %v437
          %v439 = vpop.f32.mrb[0].mxu0
          %440 = vdwg.mxu0
          %vm441 = vcmask 130048
          %v442 = vsel %vm441, %v403, 0.0
          %v443 = vsel %vm441, %v408, 0.0
          %v444 = vadd.f32 %v442, %v443
          %v445 = vsel %vm441, %v413, 0.0
          %v446 = vadd.f32 %v444, %v445
          %v447 = vsel %vm441, %v418, 0.0
          %v448 = vadd.f32 %v446, %v447
          %v449 = vsel %vm441, %v423, 0.0
          %v450 = vadd.f32 %v448, %v449
          %v451 = vsel %vm441, %v428, 0.0
          %v452 = vadd.f32 %v450, %v451
          %v453 = vsel %vm441, %v433, 0.0
          %v454 = vadd.f32 %v452, %v453
          %v455 = vsel %vm441, %v438, 0.0
          %v456 = vadd.f32 %v454, %v455
          %v457 = vrot.slane %v456, 4
          %v458 = vadd.f32 %v456, %v457
          %v459 = vrot.slane %v458, 2
          %v460 = vadd.f32 %v458, %v459
          %v461 = vrot.slane %v460, 1
          %v462 = vadd.f32 %v460, %v461
          %v463 = vrcp.pop 64.0
          %v464 = vmul.f32 %v462, %v463
          %v465 = vsub.f32 %v403, %v464
          %v466 = vsub.f32 %v408, %v464
          %v467 = vsub.f32 %v413, %v464
          %v468 = vsub.f32 %v418, %v464
          %v469 = vsub.f32 %v423, %v464
          %v470 = vsub.f32 %v428, %v464
          %v471 = vsub.f32 %v433, %v464
          %v472 = vsub.f32 %v438, %v464
          %v473 = vmul.f32 %v465, %v465
          %v474 = vmul.f32 %v466, %v466
          %v475 = vmul.f32 %v467, %v467
          %v476 = vmul.f32 %v468, %v468
          %v477 = vmul.f32 %v469, %v469
          %v478 = vmul.f32 %v470, %v470
          %v479 = vmul.f32 %v471, %v471
          %v480 = vmul.f32 %v472, %v472
          %v481 = vsel %vm441, %v473, 0.0
          %v482 = vsel %vm441, %v474, 0.0
          %v483 = vadd.f32 %v481, %v482
          %v484 = vsel %vm441, %v475, 0.0
          %v485 = vadd.f32 %v483, %v484
          %v486 = vsel %vm441, %v476, 0.0
          %v487 = vadd.f32 %v485, %v486
          %v488 = vsel %vm441, %v477, 0.0
          %v489 = vadd.f32 %v487, %v488
          %v490 = vsel %vm441, %v478, 0.0
          %v491 = vadd.f32 %v489, %v490
          %v492 = vsel %vm441, %v479, 0.0
          %v493 = vadd.f32 %v491, %v492
          %v494 = vsel %vm441, %v480, 0.0
          %v495 = vadd.f32 %v493, %v494
          %v496 = vrot.slane %v495, 4
          %v497 = vadd.f32 %v495, %v496
          %v498 = vrot.slane %v497, 2
          %v499 = vadd.f32 %v497, %v498
          %v500 = vrot.slane %v499, 1
          %v501 = vadd.f32 %v499, %v500
          %v502 = vmul.f32 %v501, %v463
          %v503 = vadd.f32 %v502, 1e-05
          %v504 = vrsqrt.pop %v503
          %v505 = vmul.f32 %v465, %v504
          %v506 = vmul.f32 %v466, %v504
          %v507 = vmul.f32 %v467, %v504
          %v508 = vmul.f32 %v468, %v504
          %v509 = vmul.f32 %v469, %v504
          %v510 = vmul.f32 %v470, %v504
          %v511 = vmul.f32 %v471, %v504
          %v512 = vmul.f32 %v472, %v504
          %513 = vset.pattern.permute.xlu0 1
          %514 = vperm.xlu0 %513, %v259
          %v515 = vpop.permute.xlu0 %514
          %517 = vset.pattern.permute.xlu0 1
          %518 = vperm.xlu0 %517, %v260
          %v519 = vpop.permute.xlu0 %518
          %521 = vset.pattern.permute.xlu0 1
          %522 = vperm.xlu0 %521, %v261
          %v523 = vpop.permute.xlu0 %522
          %525 = vset.pattern.permute.xlu0 1
          %526 = vperm.xlu0 %525, %v262
          %v527 = vpop.permute.xlu0 %526
          %529 = vset.pattern.permute.xlu0 1
          %530 = vperm.xlu0 %529, %v263
          %v531 = vpop.permute.xlu0 %530
          %533 = vset.pattern.permute.xlu0 1
          %534 = vperm.xlu0 %533, %v264
          %v535 = vpop.permute.xlu0 %534
          %537 = vset.pattern.permute.xlu0 1
          %538 = vperm.xlu0 %537, %v265
          %v539 = vpop.permute.xlu0 %538
          %541 = vset.pattern.permute.xlu0 1
          %542 = vperm.xlu0 %541, %v266
          %v543 = vpop.permute.xlu0 %542
          %v545 = vmul.f32 %v505, %v515
          %v546 = vmul.f32 %v506, %v519
          %v547 = vmul.f32 %v507, %v523
          %v548 = vmul.f32 %v508, %v527
          %v549 = vmul.f32 %v509, %v531
          %v550 = vmul.f32 %v510, %v535
          %v551 = vmul.f32 %v511, %v539
          %v552 = vmul.f32 %v512, %v543
          %553 = vset.pattern.permute.xlu0 2
          %554 = vperm.xlu0 %553, %v259
          %v555 = vpop.permute.xlu0 %554
          %557 = vset.pattern.permute.xlu0 2
          %558 = vperm.xlu0 %557, %v260
          %v559 = vpop.permute.xlu0 %558
          %561 = vset.pattern.permute.xlu0 2
          %562 = vperm.xlu0 %561, %v261
          %v563 = vpop.permute.xlu0 %562
          %565 = vset.pattern.permute.xlu0 2
          %566 = vperm.xlu0 %565, %v262
          %v567 = vpop.permute.xlu0 %566
          %569 = vset.pattern.permute.xlu0 2
          %570 = vperm.xlu0 %569, %v263
          %v571 = vpop.permute.xlu0 %570
          %573 = vset.pattern.permute.xlu0 2
          %574 = vperm.xlu0 %573, %v264
          %v575 = vpop.permute.xlu0 %574
          %577 = vset.pattern.permute.xlu0 2
          %578 = vperm.xlu0 %577, %v265
          %v579 = vpop.permute.xlu0 %578
          %581 = vset.pattern.permute.xlu0 2
          %582 = vperm.xlu0 %581, %v266
          %v583 = vpop.permute.xlu0 %582
          %v585 = vadd.f32 %v545, %v555
          %v586 = vadd.f32 %v546, %v559
          %v587 = vadd.f32 %v547, %v563
          %v588 = vadd.f32 %v548, %v567
          %v589 = vadd.f32 %v549, %v571
          %v590 = vadd.f32 %v550, %v575
          %v591 = vadd.f32 %v551, %v579
          %v592 = vadd.f32 %v552, %v583
          %v593 = vld [vmem:[%s2] sm:$0xff]
          %v594 = vld [vmem:[%s2 + $0x8] sm:$0xff]
          %v595 = vld [vmem:[%s2 + $0x10] sm:$0xff]
          %v596 = vld [vmem:[%s2 + $0x18] sm:$0xff]
          %v597 = vld [vmem:[%s2 + $0x20] sm:$0xff]
          %v598 = vld [vmem:[%s2 + $0x28] sm:$0xff]
          %v599 = vld [vmem:[%s2 + $0x30] sm:$0xff]
          %v600 = vld [vmem:[%s2 + $0x38] sm:$0xff]
          %601 = vset.pattern.permute.xlu0 3
          %602 = vperm.xlu0 %601, %v259
          %v603 = vpop.permute.xlu0 %602
          %605 = vset.pattern.permute.xlu0 3
          %606 = vperm.xlu0 %605, %v260
          %v607 = vpop.permute.xlu0 %606
          %609 = vset.pattern.permute.xlu0 3
          %610 = vperm.xlu0 %609, %v261
          %v611 = vpop.permute.xlu0 %610
          %613 = vset.pattern.permute.xlu0 3
          %614 = vperm.xlu0 %613, %v262
          %v615 = vpop.permute.xlu0 %614
          %617 = vset.pattern.permute.xlu0 3
          %618 = vperm.xlu0 %617, %v263
          %v619 = vpop.permute.xlu0 %618
          %621 = vset.pattern.permute.xlu0 3
          %622 = vperm.xlu0 %621, %v264
          %v623 = vpop.permute.xlu0 %622
          %625 = vset.pattern.permute.xlu0 3
          %626 = vperm.xlu0 %625, %v265
          %v627 = vpop.permute.xlu0 %626
          %629 = vset.pattern.permute.xlu0 3
          %630 = vperm.xlu0 %629, %v266
          %v631 = vpop.permute.xlu0 %630
          %vm633 = vcmask 523264
          %v635 = vsel %vm633, %v593, 0
          %v638 = vsel %vm633, %v594, 0
          %v641 = vsel %vm633, %v595, 0
          %v644 = vsel %vm633, %v596, 0
          %v647 = vsel %vm633, %v597, 0
          %v650 = vsel %vm633, %v598, 0
          %v653 = vsel %vm633, %v599, 0
          %v656 = vsel %vm633, %v600, 0
          %658 = vmatprep.subr.mxu0 0.0
          %659 = vmatpush1.msra.mxu0 %v585
          %660 = vmatprep.subr.mxu0 0.0
          %661 = vmatpush1.msra.mxu0 %v586
          %662 = vmatprep.subr.mxu0 0.0
          %663 = vmatpush1.msra.mxu0 %v587
          %664 = vmatprep.subr.mxu0 0.0
          %665 = vmatpush1.msra.mxu0 %v588
          %666 = vmatprep.subr.mxu0 0.0
          %667 = vmatpush1.msra.mxu0 %v589
          %668 = vmatprep.subr.mxu0 0.0
          %669 = vmatpush1.msra.mxu0 %v590
          %670 = vmatprep.subr.mxu0 0.0
          %671 = vmatpush1.msra.mxu0 %v591
          %672 = vmatprep.subr.mxu0 0.0
          %673 = vmatpush1.msra.mxu0 %v592
          %674 = vmatprep.subr.mxu0 0.0
          %675 = vmatpush1.msra.mxu0 0.0
          %676 = vmatprep.subr.mxu0 0.0
          %677 = vmatpush1.msra.mxu0 0.0
          %678 = vmatprep.subr.mxu0 0.0
          %679 = vmatpush1.msra.mxu0 0.0
          %680 = vmatprep.subr.mxu0 0.0
          %681 = vmatpush1.msra.mxu0 0.0
          %682 = vmatprep.subr.mxu0 0.0
          %683 = vmatpush1.msra.mxu0 0.0
          %684 = vmatprep.subr.mxu0 0.0
          %685 = vmatpush1.msra.mxu0 0.0
          %686 = vmatprep.subr.mxu0 0.0
          %687 = vmatpush1.msra.mxu0 0.0
          %688 = vmatprep.subr.mxu0 0.0
          %689 = vmatpush1.msra.mxu0 0.0
          %690 = vmatprep.subr.mxu0 0.0
          %691 = vmatpush1.msra.mxu0 0.0
          %692 = vmatprep.subr.mxu0 0.0
          %693 = vmatpush1.msra.mxu0 0.0
          %694 = vmatprep.subr.mxu0 0.0
          %695 = vmatpush1.msra.mxu0 0.0
          %696 = vmatprep.subr.mxu0 0.0
          %697 = vmatpush1.msra.mxu0 0.0
          %698 = vmatprep.subr.mxu0 0.0
          %699 = vmatpush1.msra.mxu0 0.0
          %700 = vmatprep.subr.mxu0 0.0
          %701 = vmatpush1.msra.mxu0 0.0
          %702 = vmatprep.subr.mxu0 0.0
          %703 = vmatpush1.msra.mxu0 0.0
          %704 = vmatprep.subr.mxu0 0.0
          %705 = vmatpush1.msra.mxu0 0.0
          %706 = vmatprep.subr.mxu0 0.0
          %707 = vmatpush1.msra.mxu0 0.0
          %708 = vmatprep.subr.mxu0 0.0
          %709 = vmatpush1.msra.mxu0 0.0
          %710 = vmatprep.subr.mxu0 0.0
          %711 = vmatpush1.msra.mxu0 0.0
          %712 = vmatprep.subr.mxu0 0.0
          %713 = vmatpush1.msra.mxu0 0.0
          %714 = vmatprep.subr.mxu0 0.0
          %715 = vmatpush1.msra.mxu0 0.0
          %716 = vmatprep.subr.mxu0 0.0
          %717 = vmatpush1.msra.mxu0 0.0
          %718 = vmatprep.subr.mxu0 0.0
          %719 = vmatpush1.msra.mxu0 0.0
          %720 = vmatprep.subr.mxu0 0.0
          %721 = vmatpush1.msra.mxu0 0.0
          %722 = vmatprep.mubr.f32.mxu0 0.0
          %723 = vmatmul.mubr.f32.gmra.mrb[0].mxu0 %v635
          %v724 = vpop.f32.mrb[0].mxu0
          %v725 = vadd.f32 %v603, %v724
          %v726 = vpop.f32.mrb[0].mxu0
          %727 = vmatprep.mubr.f32.mxu0 0.0
          %728 = vmatmul.mubr.f32.gmra.mrb[0].mxu0 %v638
          %v729 = vpop.f32.mrb[0].mxu0
          %v730 = vadd.f32 %v607, %v729
          %v731 = vpop.f32.mrb[0].mxu0
          %732 = vmatprep.mubr.f32.mxu0 0.0
          %733 = vmatmul.mubr.f32.gmra.mrb[0].mxu0 %v641
          %v734 = vpop.f32.mrb[0].mxu0
          %v735 = vadd.f32 %v611, %v734
          %v736 = vpop.f32.mrb[0].mxu0
          %737 = vmatprep.mubr.f32.mxu0 0.0
          %738 = vmatmul.mubr.f32.gmra.mrb[0].mxu0 %v644
          %v739 = vpop.f32.mrb[0].mxu0
          %v740 = vadd.f32 %v615, %v739
          %v741 = vpop.f32.mrb[0].mxu0
          %742 = vmatprep.mubr.f32.mxu0 0.0
          %743 = vmatmul.mubr.f32.gmra.mrb[0].mxu0 %v647
          %v744 = vpop.f32.mrb[0].mxu0
          %v745 = vadd.f32 %v619, %v744
          %v746 = vpop.f32.mrb[0].mxu0
          %747 = vmatprep.mubr.f32.mxu0 0.0
          %748 = vmatmul.mubr.f32.gmra.mrb[0].mxu0 %v650
          %v749 = vpop.f32.mrb[0].mxu0
          %v750 = vadd.f32 %v623, %v749
          %v751 = vpop.f32.mrb[0].mxu0
          %752 = vmatprep.mubr.f32.mxu0 0.0
          %753 = vmatmul.mubr.f32.gmra.mrb[0].mxu0 %v653
          %v754 = vpop.f32.mrb[0].mxu0
          %v755 = vadd.f32 %v627, %v754
          %v756 = vpop.f32.mrb[0].mxu0
          %757 = vmatprep.mubr.f32.mxu0 0.0
          %758 = vmatmul.mubr.f32.gmra.mrb[0].mxu0 %v656
          %v759 = vpop.f32.mrb[0].mxu0
          %v760 = vadd.f32 %v631, %v759
          %v761 = vpop.f32.mrb[0].mxu0
          %762 = vdwg.mxu0
          %vm763 = vcmask 7168
          %764 = vst.msk [vmem:[#allocation2] sm:$0xff] %vm763, %v725
          %765 = vst.msk [vmem:[#allocation2 + $0x8] sm:$0xff] %vm763, %v730
          %766 = vst.msk [vmem:[#allocation2 + $0x10] sm:$0xff] %vm763, %v735
          %767 = vst.msk [vmem:[#allocation2 + $0x18] sm:$0xff] %vm763, %v740
          %768 = vst.msk [vmem:[#allocation2 + $0x20] sm:$0xff] %vm763, %v745
          %769 = vst.msk [vmem:[#allocation2 + $0x28] sm:$0xff] %vm763, %v750
          %770 = vst.msk [vmem:[#allocation2 + $0x30] sm:$0xff] %vm763, %v755
          %771 = vst.msk [vmem:[#allocation2 + $0x38] sm:$0xff] %vm763, %v760
          %780 = vrot.lane.b32.xlu0 %v725, 127
          %v781 = vpop.permute.xlu0 %780
          %782 = vrot.lane.b32.xlu0 %v730, 127
          %v783 = vpop.permute.xlu0 %782
          %784 = vrot.lane.b32.xlu0 %v735, 127
          %v785 = vpop.permute.xlu0 %784
          %786 = vrot.lane.b32.xlu0 %v740, 127
          %v787 = vpop.permute.xlu0 %786
          %788 = vrot.lane.b32.xlu0 %v745, 127
          %v789 = vpop.permute.xlu0 %788
          %790 = vrot.lane.b32.xlu0 %v750, 127
          %v791 = vpop.permute.xlu0 %790
          %792 = vrot.lane.b32.xlu0 %v755, 127
          %v793 = vpop.permute.xlu0 %792
          %794 = vrot.lane.b32.xlu0 %v760, 127
          %v795 = vpop.permute.xlu0 %794
          %804 = vst.msk [vmem:[#allocation2 + $0x40] sm:$0xff] %vm763, %v781
          %805 = vst.msk [vmem:[#allocation2 + $0x48] sm:$0xff] %vm763, %v783
          %806 = vst.msk [vmem:[#allocation2 + $0x50] sm:$0xff] %vm763, %v785
          %807 = vst.msk [vmem:[#allocation2 + $0x58] sm:$0xff] %vm763, %v787
          %808 = vst.msk [vmem:[#allocation2 + $0x60] sm:$0xff] %vm763, %v789
          %809 = vst.msk [vmem:[#allocation2 + $0x68] sm:$0xff] %vm763, %v791
          %810 = vst.msk [vmem:[#allocation2 + $0x70] sm:$0xff] %vm763, %v793
          %811 = vst.msk [vmem:[#allocation2 + $0x78] sm:$0xff] %vm763, %v795
          %812 = vrot.lane.b32.xlu0 %v725, 126
          %v813 = vpop.permute.xlu0 %812
          %814 = vrot.lane.b32.xlu0 %v730, 126
          %v815 = vpop.permute.xlu0 %814
          %816 = vrot.lane.b32.xlu0 %v735, 126
          %v817 = vpop.permute.xlu0 %816
          %818 = vrot.lane.b32.xlu0 %v740, 126
          %v819 = vpop.permute.xlu0 %818
          %820 = vrot.lane.b32.xlu0 %v745, 126
          %v821 = vpop.permute.xlu0 %820
          %822 = vrot.lane.b32.xlu0 %v750, 126
          %v823 = vpop.permute.xlu0 %822
          %824 = vrot.lane.b32.xlu0 %v755, 126
          %v825 = vpop.permute.xlu0 %824
          %826 = vrot.lane.b32.xlu0 %v760, 126
          %v827 = vpop.permute.xlu0 %826
          %836 = vst.msk [vmem:[#allocation2 + $0x80] sm:$0xff] %vm763, %v813
          %837 = vst.msk [vmem:[#allocation2 + $0x88] sm:$0xff] %vm763, %v815
          %838 = vst.msk [vmem:[#allocation2 + $0x90] sm:$0xff] %vm763, %v817
          %839 = vst.msk [vmem:[#allocation2 + $0x98] sm:$0xff] %vm763, %v819
          %840 = vst.msk [vmem:[#allocation2 + $0xa0] sm:$0xff] %vm763, %v821
          %841 = vst.msk [vmem:[#allocation2 + $0xa8] sm:$0xff] %vm763, %v823
          %842 = vst.msk [vmem:[#allocation2 + $0xb0] sm:$0xff] %vm763, %v825
          %843 = vst.msk [vmem:[#allocation2 + $0xb8] sm:$0xff] %vm763, %v827
          %844 = vrot.lane.b32.xlu0 %v725, 125
          %v845 = vpop.permute.xlu0 %844
          %846 = vrot.lane.b32.xlu0 %v730, 125
          %v847 = vpop.permute.xlu0 %846
          %848 = vrot.lane.b32.xlu0 %v735, 125
          %v849 = vpop.permute.xlu0 %848
          %850 = vrot.lane.b32.xlu0 %v740, 125
          %v851 = vpop.permute.xlu0 %850
          %852 = vrot.lane.b32.xlu0 %v745, 125
          %v853 = vpop.permute.xlu0 %852
          %854 = vrot.lane.b32.xlu0 %v750, 125
          %v855 = vpop.permute.xlu0 %854
          %856 = vrot.lane.b32.xlu0 %v755, 125
          %v857 = vpop.permute.xlu0 %856
          %858 = vrot.lane.b32.xlu0 %v760, 125
          %v859 = vpop.permute.xlu0 %858
          %868 = vst.msk [vmem:[#allocation2 + $0xc0] sm:$0xff] %vm763, %v845
          %869 = vst.msk [vmem:[#allocation2 + $0xc8] sm:$0xff] %vm763, %v847
          %870 = vst.msk [vmem:[#allocation2 + $0xd0] sm:$0xff] %vm763, %v849
          %871 = vst.msk [vmem:[#allocation2 + $0xd8] sm:$0xff] %vm763, %v851
          %872 = vst.msk [vmem:[#allocation2 + $0xe0] sm:$0xff] %vm763, %v853
          %873 = vst.msk [vmem:[#allocation2 + $0xe8] sm:$0xff] %vm763, %v855
          %874 = vst.msk [vmem:[#allocation2 + $0xf0] sm:$0xff] %vm763, %v857
          %875 = vst.msk [vmem:[#allocation2 + $0xf8] sm:$0xff] %vm763, %v859
          %876 = vrot.lane.b32.xlu0 %v725, 124
          %v877 = vpop.permute.xlu0 %876
          %878 = vrot.lane.b32.xlu0 %v730, 124
          %v879 = vpop.permute.xlu0 %878
          %880 = vrot.lane.b32.xlu0 %v735, 124
          %v881 = vpop.permute.xlu0 %880
          %882 = vrot.lane.b32.xlu0 %v740, 124
          %v883 = vpop.permute.xlu0 %882
          %884 = vrot.lane.b32.xlu0 %v745, 124
          %v885 = vpop.permute.xlu0 %884
          %886 = vrot.lane.b32.xlu0 %v750, 124
          %v887 = vpop.permute.xlu0 %886
          %888 = vrot.lane.b32.xlu0 %v755, 124
          %v889 = vpop.permute.xlu0 %888
          %890 = vrot.lane.b32.xlu0 %v760, 124
          %v891 = vpop.permute.xlu0 %890
          %900 = vst.msk [vmem:[#allocation2 + $0x100] sm:$0xff] %vm763, %v877
          %901 = vst.msk [vmem:[#allocation2 + $0x108] sm:$0xff] %vm763, %v879
          %902 = vst.msk [vmem:[#allocation2 + $0x110] sm:$0xff] %vm763, %v881
          %903 = vst.msk [vmem:[#allocation2 + $0x118] sm:$0xff] %vm763, %v883
          %904 = vst.msk [vmem:[#allocation2 + $0x120] sm:$0xff] %vm763, %v885
          %905 = vst.msk [vmem:[#allocation2 + $0x128] sm:$0xff] %vm763, %v887
          %906 = vst.msk [vmem:[#allocation2 + $0x130] sm:$0xff] %vm763, %v889
          %907 = vst.msk [vmem:[#allocation2 + $0x138] sm:$0xff] %vm763, %v891
          %908 = vrot.lane.b32.xlu0 %v725, 123
          %v909 = vpop.permute.xlu0 %908
          %910 = vrot.lane.b32.xlu0 %v730, 123
          %v911 = vpop.permute.xlu0 %910
          %912 = vrot.lane.b32.xlu0 %v735, 123
          %v913 = vpop.permute.xlu0 %912
          %914 = vrot.lane.b32.xlu0 %v740, 123
          %v915 = vpop.permute.xlu0 %914
          %916 = vrot.lane.b32.xlu0 %v745, 123
          %v917 = vpop.permute.xlu0 %916
          %918 = vrot.lane.b32.xlu0 %v750, 123
          %v919 = vpop.permute.xlu0 %918
          %920 = vrot.lane.b32.xlu0 %v755, 123
          %v921 = vpop.permute.xlu0 %920
          %922 = vrot.lane.b32.xlu0 %v760, 123
          %v923 = vpop.permute.xlu0 %922
          %932 = vst.msk [vmem:[#allocation2 + $0x140] sm:$0xff] %vm763, %v909
          %933 = vst.msk [vmem:[#allocation2 + $0x148] sm:$0xff] %vm763, %v911
          %934 = vst.msk [vmem:[#allocation2 + $0x150] sm:$0xff] %vm763, %v913
          %935 = vst.msk [vmem:[#allocation2 + $0x158] sm:$0xff] %vm763, %v915
          %936 = vst.msk [vmem:[#allocation2 + $0x160] sm:$0xff] %vm763, %v917
          %937 = vst.msk [vmem:[#allocation2 + $0x168] sm:$0xff] %vm763, %v919
          %938 = vst.msk [vmem:[#allocation2 + $0x170] sm:$0xff] %vm763, %v921
          %939 = vst.msk [vmem:[#allocation2 + $0x178] sm:$0xff] %vm763, %v923
          %940 = vrot.lane.b32.xlu0 %v725, 122
          %v941 = vpop.permute.xlu0 %940
          %942 = vrot.lane.b32.xlu0 %v730, 122
          %v943 = vpop.permute.xlu0 %942
          %944 = vrot.lane.b32.xlu0 %v735, 122
          %v945 = vpop.permute.xlu0 %944
          %946 = vrot.lane.b32.xlu0 %v740, 122
          %v947 = vpop.permute.xlu0 %946
          %948 = vrot.lane.b32.xlu0 %v745, 122
          %v949 = vpop.permute.xlu0 %948
          %950 = vrot.lane.b32.xlu0 %v750, 122
          %v951 = vpop.permute.xlu0 %950
          %952 = vrot.lane.b32.xlu0 %v755, 122
          %v953 = vpop.permute.xlu0 %952
          %954 = vrot.lane.b32.xlu0 %v760, 122
          %v955 = vpop.permute.xlu0 %954
          %964 = vst.msk [vmem:[#allocation2 + $0x180] sm:$0xff] %vm763, %v941
          %965 = vst.msk [vmem:[#allocation2 + $0x188] sm:$0xff] %vm763, %v943
          %966 = vst.msk [vmem:[#allocation2 + $0x190] sm:$0xff] %vm763, %v945
          %967 = vst.msk [vmem:[#allocation2 + $0x198] sm:$0xff] %vm763, %v947
          %968 = vst.msk [vmem:[#allocation2 + $0x1a0] sm:$0xff] %vm763, %v949
          %969 = vst.msk [vmem:[#allocation2 + $0x1a8] sm:$0xff] %vm763, %v951
          %970 = vst.msk [vmem:[#allocation2 + $0x1b0] sm:$0xff] %vm763, %v953
          %971 = vst.msk [vmem:[#allocation2 + $0x1b8] sm:$0xff] %vm763, %v955
          %972 = vrot.lane.b32.xlu0 %v725, 121
          %v973 = vpop.permute.xlu0 %972
          %974 = vrot.lane.b32.xlu0 %v730, 121
          %v975 = vpop.permute.xlu0 %974
          %976 = vrot.lane.b32.xlu0 %v735, 121
          %v977 = vpop.permute.xlu0 %976
          %978 = vrot.lane.b32.xlu0 %v740, 121
          %v979 = vpop.permute.xlu0 %978
          %980 = vrot.lane.b32.xlu0 %v745, 121
          %v981 = vpop.permute.xlu0 %980
          %982 = vrot.lane.b32.xlu0 %v750, 121
          %v983 = vpop.permute.xlu0 %982
          %984 = vrot.lane.b32.xlu0 %v755, 121
          %v985 = vpop.permute.xlu0 %984
          %986 = vrot.lane.b32.xlu0 %v760, 121
          %v987 = vpop.permute.xlu0 %986
          %996 = vst.msk [vmem:[#allocation2 + $0x1c0] sm:$0xff] %vm763, %v973
          %997 = vst.msk [vmem:[#allocation2 + $0x1c8] sm:$0xff] %vm763, %v975
          %998 = vst.msk [vmem:[#allocation2 + $0x1d0] sm:$0xff] %vm763, %v977
          %999 = vst.msk [vmem:[#allocation2 + $0x1d8] sm:$0xff] %vm763, %v979
          %1000 = vst.msk [vmem:[#allocation2 + $0x1e0] sm:$0xff] %vm763, %v981
          %1001 = vst.msk [vmem:[#allocation2 + $0x1e8] sm:$0xff] %vm763, %v983
          %1002 = vst.msk [vmem:[#allocation2 + $0x1f0] sm:$0xff] %vm763, %v985
          %1003 = vst.msk [vmem:[#allocation2 + $0x1f8] sm:$0xff] %vm763, %v987
          %1004 = vrot.lane.b32.xlu0 %v725, 120
          %v1005 = vpop.permute.xlu0 %1004
          %1006 = vrot.lane.b32.xlu0 %v730, 120
          %v1007 = vpop.permute.xlu0 %1006
          %1008 = vrot.lane.b32.xlu0 %v735, 120
          %v1009 = vpop.permute.xlu0 %1008
          %1010 = vrot.lane.b32.xlu0 %v740, 120
          %v1011 = vpop.permute.xlu0 %1010
          %1012 = vrot.lane.b32.xlu0 %v745, 120
          %v1013 = vpop.permute.xlu0 %1012
          %1014 = vrot.lane.b32.xlu0 %v750, 120
          %v1015 = vpop.permute.xlu0 %1014
          %1016 = vrot.lane.b32.xlu0 %v755, 120
          %v1017 = vpop.permute.xlu0 %1016
          %1018 = vrot.lane.b32.xlu0 %v760, 120
          %v1019 = vpop.permute.xlu0 %1018
          %1028 = vst.msk [vmem:[#allocation2 + $0x200] sm:$0xff] %vm763, %v1005
          %1029 = vst.msk [vmem:[#allocation2 + $0x208] sm:$0xff] %vm763, %v1007
          %1030 = vst.msk [vmem:[#allocation2 + $0x210] sm:$0xff] %vm763, %v1009
          %1031 = vst.msk [vmem:[#allocation2 + $0x218] sm:$0xff] %vm763, %v1011
          %1032 = vst.msk [vmem:[#allocation2 + $0x220] sm:$0xff] %vm763, %v1013
          %1033 = vst.msk [vmem:[#allocation2 + $0x228] sm:$0xff] %vm763, %v1015
          %1034 = vst.msk [vmem:[#allocation2 + $0x230] sm:$0xff] %vm763, %v1017
          %1035 = vst.msk [vmem:[#allocation2 + $0x238] sm:$0xff] %vm763, %v1019
          %1036 = vrot.lane.b32.xlu0 %v725, 119
          %v1037 = vpop.permute.xlu0 %1036
          %1038 = vrot.lane.b32.xlu0 %v730, 119
          %v1039 = vpop.permute.xlu0 %1038
          %1040 = vrot.lane.b32.xlu0 %v735, 119
          %v1041 = vpop.permute.xlu0 %1040
          %1042 = vrot.lane.b32.xlu0 %v740, 119
          %v1043 = vpop.permute.xlu0 %1042
          %1044 = vrot.lane.b32.xlu0 %v745, 119
          %v1045 = vpop.permute.xlu0 %1044
          %1046 = vrot.lane.b32.xlu0 %v750, 119
          %v1047 = vpop.permute.xlu0 %1046
          %1048 = vrot.lane.b32.xlu0 %v755, 119
          %v1049 = vpop.permute.xlu0 %1048
          %1050 = vrot.lane.b32.xlu0 %v760, 119
          %v1051 = vpop.permute.xlu0 %1050
          %1060 = vst.msk [vmem:[#allocation2 + $0x240] sm:$0xff] %vm763, %v1037
          %1061 = vst.msk [vmem:[#allocation2 + $0x248] sm:$0xff] %vm763, %v1039
          %1062 = vst.msk [vmem:[#allocation2 + $0x250] sm:$0xff] %vm763, %v1041
          %1063 = vst.msk [vmem:[#allocation2 + $0x258] sm:$0xff] %vm763, %v1043
          %1064 = vst.msk [vmem:[#allocation2 + $0x260] sm:$0xff] %vm763, %v1045
          %1065 = vst.msk [vmem:[#allocation2 + $0x268] sm:$0xff] %vm763, %v1047
          %1066 = vst.msk [vmem:[#allocation2 + $0x270] sm:$0xff] %vm763, %v1049
          %1067 = vst.msk [vmem:[#allocation2 + $0x278] sm:$0xff] %vm763, %v1051
          %1068 = vrot.lane.b32.xlu0 %v725, 118
          %v1069 = vpop.permute.xlu0 %1068
          %1070 = vrot.lane.b32.xlu0 %v730, 118
          %v1071 = vpop.permute.xlu0 %1070
          %1072 = vrot.lane.b32.xlu0 %v735, 118
          %v1073 = vpop.permute.xlu0 %1072
          %1074 = vrot.lane.b32.xlu0 %v740, 118
          %v1075 = vpop.permute.xlu0 %1074
          %1076 = vrot.lane.b32.xlu0 %v745, 118
          %v1077 = vpop.permute.xlu0 %1076
          %1078 = vrot.lane.b32.xlu0 %v750, 118
          %v1079 = vpop.permute.xlu0 %1078
          %1080 = vrot.lane.b32.xlu0 %v755, 118
          %v1081 = vpop.permute.xlu0 %1080
          %1082 = vrot.lane.b32.xlu0 %v760, 118
          %v1083 = vpop.permute.xlu0 %1082
          %1092 = vst.msk [vmem:[#allocation2 + $0x280] sm:$0xff] %vm763, %v1069
          %1093 = vst.msk [vmem:[#allocation2 + $0x288] sm:$0xff] %vm763, %v1071
          %1094 = vst.msk [vmem:[#allocation2 + $0x290] sm:$0xff] %vm763, %v1073
          %1095 = vst.msk [vmem:[#allocation2 + $0x298] sm:$0xff] %vm763, %v1075
          %1096 = vst.msk [vmem:[#allocation2 + $0x2a0] sm:$0xff] %vm763, %v1077
          %1097 = vst.msk [vmem:[#allocation2 + $0x2a8] sm:$0xff] %vm763, %v1079
          %1098 = vst.msk [vmem:[#allocation2 + $0x2b0] sm:$0xff] %vm763, %v1081
          %1099 = vst.msk [vmem:[#allocation2 + $0x2b8] sm:$0xff] %vm763, %v1083
          %1100 = vrot.lane.b32.xlu0 %v725, 117
          %v1101 = vpop.permute.xlu0 %1100
          %1102 = vrot.lane.b32.xlu0 %v730, 117
          %v1103 = vpop.permute.xlu0 %1102
          %1104 = vrot.lane.b32.xlu0 %v735, 117
          %v1105 = vpop.permute.xlu0 %1104
          %1106 = vrot.lane.b32.xlu0 %v740, 117
          %v1107 = vpop.permute.xlu0 %1106
          %1108 = vrot.lane.b32.xlu0 %v745, 117
          %v1109 = vpop.permute.xlu0 %1108
          %1110 = vrot.lane.b32.xlu0 %v750, 117
          %v1111 = vpop.permute.xlu0 %1110
          %1112 = vrot.lane.b32.xlu0 %v755, 117
          %v1113 = vpop.permute.xlu0 %1112
          %1114 = vrot.lane.b32.xlu0 %v760, 117
          %v1115 = vpop.permute.xlu0 %1114
          %1124 = vst.msk [vmem:[#allocation2 + $0x2c0] sm:$0xff] %vm763, %v1101
          %1125 = vst.msk [vmem:[#allocation2 + $0x2c8] sm:$0xff] %vm763, %v1103
          %1126 = vst.msk [vmem:[#allocation2 + $0x2d0] sm:$0xff] %vm763, %v1105
          %1127 = vst.msk [vmem:[#allocation2 + $0x2d8] sm:$0xff] %vm763, %v1107
          %1128 = vst.msk [vmem:[#allocation2 + $0x2e0] sm:$0xff] %vm763, %v1109
          %1129 = vst.msk [vmem:[#allocation2 + $0x2e8] sm:$0xff] %vm763, %v1111
          %1130 = vst.msk [vmem:[#allocation2 + $0x2f0] sm:$0xff] %vm763, %v1113
          %1131 = vst.msk [vmem:[#allocation2 + $0x2f8] sm:$0xff] %vm763, %v1115
          %1132 = vrot.lane.b32.xlu0 %v725, 116
          %v1133 = vpop.permute.xlu0 %1132
          %1134 = vrot.lane.b32.xlu0 %v730, 116
          %v1135 = vpop.permute.xlu0 %1134
          %1136 = vrot.lane.b32.xlu0 %v735, 116
          %v1137 = vpop.permute.xlu0 %1136
          %1138 = vrot.lane.b32.xlu0 %v740, 116
          %v1139 = vpop.permute.xlu0 %1138
          %1140 = vrot.lane.b32.xlu0 %v745, 116
          %v1141 = vpop.permute.xlu0 %1140
          %1142 = vrot.lane.b32.xlu0 %v750, 116
          %v1143 = vpop.permute.xlu0 %1142
          %1144 = vrot.lane.b32.xlu0 %v755, 116
          %v1145 = vpop.permute.xlu0 %1144
          %1146 = vrot.lane.b32.xlu0 %v760, 116
          %v1147 = vpop.permute.xlu0 %1146
          %1156 = vst.msk [vmem:[#allocation2 + $0x300] sm:$0xff] %vm763, %v1133
          %1157 = vst.msk [vmem:[#allocation2 + $0x308] sm:$0xff] %vm763, %v1135
          %1158 = vst.msk [vmem:[#allocation2 + $0x310] sm:$0xff] %vm763, %v1137
          %1159 = vst.msk [vmem:[#allocation2 + $0x318] sm:$0xff] %vm763, %v1139
          %1160 = vst.msk [vmem:[#allocation2 + $0x320] sm:$0xff] %vm763, %v1141
          %1161 = vst.msk [vmem:[#allocation2 + $0x328] sm:$0xff] %vm763, %v1143
          %1162 = vst.msk [vmem:[#allocation2 + $0x330] sm:$0xff] %vm763, %v1145
          %1163 = vst.msk [vmem:[#allocation2 + $0x338] sm:$0xff] %vm763, %v1147
          %1164 = vrot.lane.b32.xlu0 %v725, 115
          %v1165 = vpop.permute.xlu0 %1164
          %1166 = vrot.lane.b32.xlu0 %v730, 115
          %v1167 = vpop.permute.xlu0 %1166
          %1168 = vrot.lane.b32.xlu0 %v735, 115
          %v1169 = vpop.permute.xlu0 %1168
          %1170 = vrot.lane.b32.xlu0 %v740, 115
          %v1171 = vpop.permute.xlu0 %1170
          %1172 = vrot.lane.b32.xlu0 %v745, 115
          %v1173 = vpop.permute.xlu0 %1172
          %1174 = vrot.lane.b32.xlu0 %v750, 115
          %v1175 = vpop.permute.xlu0 %1174
          %1176 = vrot.lane.b32.xlu0 %v755, 115
          %v1177 = vpop.permute.xlu0 %1176
          %1178 = vrot.lane.b32.xlu0 %v760, 115
          %v1179 = vpop.permute.xlu0 %1178
          %1188 = vst.msk [vmem:[#allocation2 + $0x340] sm:$0xff] %vm763, %v1165
          %1189 = vst.msk [vmem:[#allocation2 + $0x348] sm:$0xff] %vm763, %v1167
          %1190 = vst.msk [vmem:[#allocation2 + $0x350] sm:$0xff] %vm763, %v1169
          %1191 = vst.msk [vmem:[#allocation2 + $0x358] sm:$0xff] %vm763, %v1171
          %1192 = vst.msk [vmem:[#allocation2 + $0x360] sm:$0xff] %vm763, %v1173
          %1193 = vst.msk [vmem:[#allocation2 + $0x368] sm:$0xff] %vm763, %v1175
          %1194 = vst.msk [vmem:[#allocation2 + $0x370] sm:$0xff] %vm763, %v1177
          %1195 = vst.msk [vmem:[#allocation2 + $0x378] sm:$0xff] %vm763, %v1179
          %1196 = vrot.lane.b32.xlu0 %v725, 114
          %v1197 = vpop.permute.xlu0 %1196
          %1198 = vrot.lane.b32.xlu0 %v730, 114
          %v1199 = vpop.permute.xlu0 %1198
          %1200 = vrot.lane.b32.xlu0 %v735, 114
          %v1201 = vpop.permute.xlu0 %1200
          %1202 = vrot.lane.b32.xlu0 %v740, 114
          %v1203 = vpop.permute.xlu0 %1202
          %1204 = vrot.lane.b32.xlu0 %v745, 114
          %v1205 = vpop.permute.xlu0 %1204
          %1206 = vrot.lane.b32.xlu0 %v750, 114
          %v1207 = vpop.permute.xlu0 %1206
          %1208 = vrot.lane.b32.xlu0 %v755, 114
          %v1209 = vpop.permute.xlu0 %1208
          %1210 = vrot.lane.b32.xlu0 %v760, 114
          %v1211 = vpop.permute.xlu0 %1210
          %1220 = vst.msk [vmem:[#allocation2 + $0x380] sm:$0xff] %vm763, %v1197
          %1221 = vst.msk [vmem:[#allocation2 + $0x388] sm:$0xff] %vm763, %v1199
          %1222 = vst.msk [vmem:[#allocation2 + $0x390] sm:$0xff] %vm763, %v1201
          %1223 = vst.msk [vmem:[#allocation2 + $0x398] sm:$0xff] %vm763, %v1203
          %1224 = vst.msk [vmem:[#allocation2 + $0x3a0] sm:$0xff] %vm763, %v1205
          %1225 = vst.msk [vmem:[#allocation2 + $0x3a8] sm:$0xff] %vm763, %v1207
          %1226 = vst.msk [vmem:[#allocation2 + $0x3b0] sm:$0xff] %vm763, %v1209
          %1227 = vst.msk [vmem:[#allocation2 + $0x3b8] sm:$0xff] %vm763, %v1211
          %1228 = vrot.lane.b32.xlu0 %v725, 113
          %v1229 = vpop.permute.xlu0 %1228
          %1230 = vrot.lane.b32.xlu0 %v730, 113
          %v1231 = vpop.permute.xlu0 %1230
          %1232 = vrot.lane.b32.xlu0 %v735, 113
          %v1233 = vpop.permute.xlu0 %1232
          %1234 = vrot.lane.b32.xlu0 %v740, 113
          %v1235 = vpop.permute.xlu0 %1234
          %1236 = vrot.lane.b32.xlu0 %v745, 113
          %v1237 = vpop.permute.xlu0 %1236
          %1238 = vrot.lane.b32.xlu0 %v750, 113
          %v1239 = vpop.permute.xlu0 %1238
          %1240 = vrot.lane.b32.xlu0 %v755, 113
          %v1241 = vpop.permute.xlu0 %1240
          %1242 = vrot.lane.b32.xlu0 %v760, 113
          %v1243 = vpop.permute.xlu0 %1242
          %1252 = vst.msk [vmem:[#allocation2 + $0x3c0] sm:$0xff] %vm763, %v1229
          %1253 = vst.msk [vmem:[#allocation2 + $0x3c8] sm:$0xff] %vm763, %v1231
          %1254 = vst.msk [vmem:[#allocation2 + $0x3d0] sm:$0xff] %vm763, %v1233
          %1255 = vst.msk [vmem:[#allocation2 + $0x3d8] sm:$0xff] %vm763, %v1235
          %1256 = vst.msk [vmem:[#allocation2 + $0x3e0] sm:$0xff] %vm763, %v1237
          %1257 = vst.msk [vmem:[#allocation2 + $0x3e8] sm:$0xff] %vm763, %v1239
          %1258 = vst.msk [vmem:[#allocation2 + $0x3f0] sm:$0xff] %vm763, %v1241
          %1259 = vst.msk [vmem:[#allocation2 + $0x3f8] sm:$0xff] %vm763, %v1243
        $region48: #{tpu_custom_call.1} parent=39 // pred_fallthru
          _
        %s1260 = smul.u32 %s22, 512
        %s1261 = scalar_lea.vmem [#allocation2], %s1260
        %v1262 = vld [vmem:[%s1261] sm:$0xff]
        %v1263 = vld [vmem:[%s1261 + $0x8] sm:$0xff]
        %v1264 = vld [vmem:[%s1261 + $0x10] sm:$0xff]
        %v1265 = vld [vmem:[%s1261 + $0x18] sm:$0xff]
        %v1266 = vld [vmem:[%s1261 + $0x20] sm:$0xff]
        %v1267 = vld [vmem:[%s1261 + $0x28] sm:$0xff]
        %v1268 = vld [vmem:[%s1261 + $0x30] sm:$0xff]
        %v1269 = vld [vmem:[%s1261 + $0x38] sm:$0xff]
        %v1270 = vld [vmem:[%s1261 + $0x40] sm:$0xff]
        %v1271 = vld [vmem:[%s1261 + $0x48] sm:$0xff]
        %v1272 = vld [vmem:[%s1261 + $0x50] sm:$0xff]
        %v1273 = vld [vmem:[%s1261 + $0x58] sm:$0xff]
        %v1274 = vld [vmem:[%s1261 + $0x60] sm:$0xff]
        %v1275 = vld [vmem:[%s1261 + $0x68] sm:$0xff]
        %v1276 = vld [vmem:[%s1261 + $0x70] sm:$0xff]
        %v1277 = vld [vmem:[%s1261 + $0x78] sm:$0xff]
        %v1278 = vld [vmem:[%s1261 + $0x80] sm:$0xff]
        %v1279 = vld [vmem:[%s1261 + $0x88] sm:$0xff]
        %v1280 = vld [vmem:[%s1261 + $0x90] sm:$0xff]
        %v1281 = vld [vmem:[%s1261 + $0x98] sm:$0xff]
        %v1282 = vld [vmem:[%s1261 + $0xa0] sm:$0xff]
        %v1283 = vld [vmem:[%s1261 + $0xa8] sm:$0xff]
        %v1284 = vld [vmem:[%s1261 + $0xb0] sm:$0xff]
        %v1285 = vld [vmem:[%s1261 + $0xb8] sm:$0xff]
        %v1286 = vld [vmem:[%s1261 + $0xc0] sm:$0xff]
        %v1287 = vld [vmem:[%s1261 + $0xc8] sm:$0xff]
        %v1288 = vld [vmem:[%s1261 + $0xd0] sm:$0xff]
        %v1289 = vld [vmem:[%s1261 + $0xd8] sm:$0xff]
        %v1290 = vld [vmem:[%s1261 + $0xe0] sm:$0xff]
        %v1291 = vld [vmem:[%s1261 + $0xe8] sm:$0xff]
        %v1292 = vld [vmem:[%s1261 + $0xf0] sm:$0xff]
        %v1293 = vld [vmem:[%s1261 + $0xf8] sm:$0xff]
        %v1294 = vld [vmem:[%s1261 + $0x100] sm:$0xff]
        %v1295 = vld [vmem:[%s1261 + $0x108] sm:$0xff]
        %v1296 = vld [vmem:[%s1261 + $0x110] sm:$0xff]
        %v1297 = vld [vmem:[%s1261 + $0x118] sm:$0xff]
        %v1298 = vld [vmem:[%s1261 + $0x120] sm:$0xff]
        %v1299 = vld [vmem:[%s1261 + $0x128] sm:$0xff]
        %v1300 = vld [vmem:[%s1261 + $0x130] sm:$0xff]
        %v1301 = vld [vmem:[%s1261 + $0x138] sm:$0xff]
        %v1302 = vld [vmem:[%s1261 + $0x140] sm:$0xff]
        %v1303 = vld [vmem:[%s1261 + $0x148] sm:$0xff]
        %v1304 = vld [vmem:[%s1261 + $0x150] sm:$0xff]
        %v1305 = vld [vmem:[%s1261 + $0x158] sm:$0xff]
        %v1306 = vld [vmem:[%s1261 + $0x160] sm:$0xff]
        %v1307 = vld [vmem:[%s1261 + $0x168] sm:$0xff]
        %v1308 = vld [vmem:[%s1261 + $0x170] sm:$0xff]
        %v1309 = vld [vmem:[%s1261 + $0x178] sm:$0xff]
        %v1310 = vld [vmem:[%s1261 + $0x180] sm:$0xff]
        %v1311 = vld [vmem:[%s1261 + $0x188] sm:$0xff]
        %v1312 = vld [vmem:[%s1261 + $0x190] sm:$0xff]
        %v1313 = vld [vmem:[%s1261 + $0x198] sm:$0xff]
        %v1314 = vld [vmem:[%s1261 + $0x1a0] sm:$0xff]
        %v1315 = vld [vmem:[%s1261 + $0x1a8] sm:$0xff]
        %v1316 = vld [vmem:[%s1261 + $0x1b0] sm:$0xff]
        %v1317 = vld [vmem:[%s1261 + $0x1b8] sm:$0xff]
        %v1318 = vld [vmem:[%s1261 + $0x1c0] sm:$0xff]
        %v1319 = vld [vmem:[%s1261 + $0x1c8] sm:$0xff]
        %v1320 = vld [vmem:[%s1261 + $0x1d0] sm:$0xff]
        %v1321 = vld [vmem:[%s1261 + $0x1d8] sm:$0xff]
        %v1322 = vld [vmem:[%s1261 + $0x1e0] sm:$0xff]
        %v1323 = vld [vmem:[%s1261 + $0x1e8] sm:$0xff]
        %v1324 = vld [vmem:[%s1261 + $0x1f0] sm:$0xff]
        %v1325 = vld [vmem:[%s1261 + $0x1f8] sm:$0xff]
        %v1326 = vld [vmem:[%s217] sm:$0xff]
        %v1327 = vld [vmem:[%s217 + $0x8] sm:$0xff]
        %v1328 = vld [vmem:[%s217 + $0x10] sm:$0xff]
        %v1329 = vld [vmem:[%s217 + $0x18] sm:$0xff]
        %v1330 = vld [vmem:[%s217 + $0x20] sm:$0xff]
        %v1331 = vld [vmem:[%s217 + $0x28] sm:$0xff]
        %v1332 = vld [vmem:[%s217 + $0x30] sm:$0xff]
        %v1333 = vld [vmem:[%s217 + $0x38] sm:$0xff]
        %v1334 = vld [vmem:[%s217 + $0x40] sm:$0xff]
        %v1335 = vld [vmem:[%s217 + $0x48] sm:$0xff]
        %v1336 = vld [vmem:[%s217 + $0x50] sm:$0xff]
        %v1337 = vld [vmem:[%s217 + $0x58] sm:$0xff]
        %v1338 = vld [vmem:[%s217 + $0x60] sm:$0xff]
        %v1339 = vld [vmem:[%s217 + $0x68] sm:$0xff]
        %v1340 = vld [vmem:[%s217 + $0x70] sm:$0xff]
        %v1341 = vld [vmem:[%s217 + $0x78] sm:$0xff]
        %v1342 = vld [vmem:[%s217 + $0x80] sm:$0xff]
        %v1343 = vld [vmem:[%s217 + $0x88] sm:$0xff]
        %v1344 = vld [vmem:[%s217 + $0x90] sm:$0xff]
        %v1345 = vld [vmem:[%s217 + $0x98] sm:$0xff]
        %v1346 = vld [vmem:[%s217 + $0xa0] sm:$0xff]
        %v1347 = vld [vmem:[%s217 + $0xa8] sm:$0xff]
        %v1348 = vld [vmem:[%s217 + $0xb0] sm:$0xff]
        %v1349 = vld [vmem:[%s217 + $0xb8] sm:$0xff]
        %v1350 = vld [vmem:[%s217 + $0xc0] sm:$0xff]
        %v1351 = vld [vmem:[%s217 + $0xc8] sm:$0xff]
        %v1352 = vld [vmem:[%s217 + $0xd0] sm:$0xff]
        %v1353 = vld [vmem:[%s217 + $0xd8] sm:$0xff]
        %v1354 = vld [vmem:[%s217 + $0xe0] sm:$0xff]
        %v1355 = vld [vmem:[%s217 + $0xe8] sm:$0xff]
        %v1356 = vld [vmem:[%s217 + $0xf0] sm:$0xff]
        %v1357 = vld [vmem:[%s217 + $0xf8] sm:$0xff]
        %v1358 = vld [vmem:[%s217 + $0x100] sm:$0xff]
        %v1359 = vld [vmem:[%s217 + $0x108] sm:$0xff]
        %v1360 = vld [vmem:[%s217 + $0x110] sm:$0xff]
        %v1361 = vld [vmem:[%s217 + $0x118] sm:$0xff]
        %v1362 = vld [vmem:[%s217 + $0x120] sm:$0xff]
        %v1363 = vld [vmem:[%s217 + $0x128] sm:$0xff]
        %v1364 = vld [vmem:[%s217 + $0x130] sm:$0xff]
        %v1365 = vld [vmem:[%s217 + $0x138] sm:$0xff]
        %v1366 = vld [vmem:[%s217 + $0x140] sm:$0xff]
        %v1367 = vld [vmem:[%s217 + $0x148] sm:$0xff]
        %v1368 = vld [vmem:[%s217 + $0x150] sm:$0xff]
        %v1369 = vld [vmem:[%s217 + $0x158] sm:$0xff]
        %v1370 = vld [vmem:[%s217 + $0x160] sm:$0xff]
        %v1371 = vld [vmem:[%s217 + $0x168] sm:$0xff]
        %v1372 = vld [vmem:[%s217 + $0x170] sm:$0xff]
        %v1373 = vld [vmem:[%s217 + $0x178] sm:$0xff]
        %v1374 = vld [vmem:[%s217 + $0x180] sm:$0xff]
        %v1375 = vld [vmem:[%s217 + $0x188] sm:$0xff]
        %v1376 = vld [vmem:[%s217 + $0x190] sm:$0xff]
        %v1377 = vld [vmem:[%s217 + $0x198] sm:$0xff]
        %v1378 = vld [vmem:[%s217 + $0x1a0] sm:$0xff]
        %v1379 = vld [vmem:[%s217 + $0x1a8] sm:$0xff]
        %v1380 = vld [vmem:[%s217 + $0x1b0] sm:$0xff]
        %v1381 = vld [vmem:[%s217 + $0x1b8] sm:$0xff]
        %v1382 = vld [vmem:[%s217 + $0x1c0] sm:$0xff]
        %v1383 = vld [vmem:[%s217 + $0x1c8] sm:$0xff]
        %v1384 = vld [vmem:[%s217 + $0x1d0] sm:$0xff]
        %v1385 = vld [vmem:[%s217 + $0x1d8] sm:$0xff]
        %v1386 = vld [vmem:[%s217 + $0x1e0] sm:$0xff]
        %v1387 = vld [vmem:[%s217 + $0x1e8] sm:$0xff]
        %v1388 = vld [vmem:[%s217 + $0x1f0] sm:$0xff]
        %v1389 = vld [vmem:[%s217 + $0x1f8] sm:$0xff]
        %v1390 = vld [vmem:[%s217 + $0x200] sm:$0xff]
        %v1391 = vld [vmem:[%s217 + $0x208] sm:$0xff]
        %v1392 = vld [vmem:[%s217 + $0x210] sm:$0xff]
        %v1393 = vld [vmem:[%s217 + $0x218] sm:$0xff]
        %v1394 = vld [vmem:[%s217 + $0x220] sm:$0xff]
        %v1395 = vld [vmem:[%s217 + $0x228] sm:$0xff]
        %v1396 = vld [vmem:[%s217 + $0x230] sm:$0xff]
        %v1397 = vld [vmem:[%s217 + $0x238] sm:$0xff]
        %v1398 = vld [vmem:[%s217 + $0x240] sm:$0xff]
        %v1399 = vld [vmem:[%s217 + $0x248] sm:$0xff]
        %v1400 = vld [vmem:[%s217 + $0x250] sm:$0xff]
        %v1401 = vld [vmem:[%s217 + $0x258] sm:$0xff]
        %v1402 = vld [vmem:[%s217 + $0x260] sm:$0xff]
        %v1403 = vld [vmem:[%s217 + $0x268] sm:$0xff]
        %v1404 = vld [vmem:[%s217 + $0x270] sm:$0xff]
        %v1405 = vld [vmem:[%s217 + $0x278] sm:$0xff]
        %v1406 = vld [vmem:[%s217 + $0x280] sm:$0xff]
        %v1407 = vld [vmem:[%s217 + $0x288] sm:$0xff]
        %v1408 = vld [vmem:[%s217 + $0x290] sm:$0xff]
        %v1409 = vld [vmem:[%s217 + $0x298] sm:$0xff]
        %v1410 = vld [vmem:[%s217 + $0x2a0] sm:$0xff]
        %v1411 = vld [vmem:[%s217 + $0x2a8] sm:$0xff]
        %v1412 = vld [vmem:[%s217 + $0x2b0] sm:$0xff]
        %v1413 = vld [vmem:[%s217 + $0x2b8] sm:$0xff]
        %v1414 = vld [vmem:[%s217 + $0x2c0] sm:$0xff]
        %v1415 = vld [vmem:[%s217 + $0x2c8] sm:$0xff]
        %v1416 = vld [vmem:[%s217 + $0x2d0] sm:$0xff]
        %v1417 = vld [vmem:[%s217 + $0x2d8] sm:$0xff]
        %v1418 = vld [vmem:[%s217 + $0x2e0] sm:$0xff]
        %v1419 = vld [vmem:[%s217 + $0x2e8] sm:$0xff]
        %v1420 = vld [vmem:[%s217 + $0x2f0] sm:$0xff]
        %v1421 = vld [vmem:[%s217 + $0x2f8] sm:$0xff]
        %v1422 = vld [vmem:[%s217 + $0x300] sm:$0xff]
        %v1423 = vld [vmem:[%s217 + $0x308] sm:$0xff]
        %v1424 = vld [vmem:[%s217 + $0x310] sm:$0xff]
        %v1425 = vld [vmem:[%s217 + $0x318] sm:$0xff]
        %v1426 = vld [vmem:[%s217 + $0x320] sm:$0xff]
        %v1427 = vld [vmem:[%s217 + $0x328] sm:$0xff]
        %v1428 = vld [vmem:[%s217 + $0x330] sm:$0xff]
        %v1429 = vld [vmem:[%s217 + $0x338] sm:$0xff]
        %v1430 = vld [vmem:[%s217 + $0x340] sm:$0xff]
        %v1431 = vld [vmem:[%s217 + $0x348] sm:$0xff]
        %v1432 = vld [vmem:[%s217 + $0x350] sm:$0xff]
        %v1433 = vld [vmem:[%s217 + $0x358] sm:$0xff]
        %v1434 = vld [vmem:[%s217 + $0x360] sm:$0xff]
        %v1435 = vld [vmem:[%s217 + $0x368] sm:$0xff]
        %v1436 = vld [vmem:[%s217 + $0x370] sm:$0xff]
        %v1437 = vld [vmem:[%s217 + $0x378] sm:$0xff]
        %v1438 = vld [vmem:[%s217 + $0x380] sm:$0xff]
        %v1439 = vld [vmem:[%s217 + $0x388] sm:$0xff]
        %v1440 = vld [vmem:[%s217 + $0x390] sm:$0xff]
        %v1441 = vld [vmem:[%s217 + $0x398] sm:$0xff]
        %v1442 = vld [vmem:[%s217 + $0x3a0] sm:$0xff]
        %v1443 = vld [vmem:[%s217 + $0x3a8] sm:$0xff]
        %v1444 = vld [vmem:[%s217 + $0x3b0] sm:$0xff]
        %v1445 = vld [vmem:[%s217 + $0x3b8] sm:$0xff]
        %v1446 = vld [vmem:[%s217 + $0x3c0] sm:$0xff]
        %v1447 = vld [vmem:[%s217 + $0x3c8] sm:$0xff]
        %v1448 = vld [vmem:[%s217 + $0x3d0] sm:$0xff]
        %v1449 = vld [vmem:[%s217 + $0x3d8] sm:$0xff]
        %v1450 = vld [vmem:[%s217 + $0x3e0] sm:$0xff]
        %v1451 = vld [vmem:[%s217 + $0x3e8] sm:$0xff]
        %v1452 = vld [vmem:[%s217 + $0x3f0] sm:$0xff]
        %v1453 = vld [vmem:[%s217 + $0x3f8] sm:$0xff]
        %1455 = vset.pattern.permute.xlu0 0
        %1456 = vperm.xlu0 %1455, %v1262
        %v1457 = vpop.permute.xlu0 %1456
        %1460 = vset.pattern.permute.xlu0 0
        %1461 = vperm.xlu0 %1460, %v1263
        %v1462 = vpop.permute.xlu0 %1461
        %1465 = vset.pattern.permute.xlu0 0
        %1466 = vperm.xlu0 %1465, %v1264
        %v1467 = vpop.permute.xlu0 %1466
        %1470 = vset.pattern.permute.xlu0 0
        %1471 = vperm.xlu0 %1470, %v1265
        %v1472 = vpop.permute.xlu0 %1471
        %1475 = vset.pattern.permute.xlu0 0
        %1476 = vperm.xlu0 %1475, %v1266
        %v1477 = vpop.permute.xlu0 %1476
        %1480 = vset.pattern.permute.xlu0 0
        %1481 = vperm.xlu0 %1480, %v1267
        %v1482 = vpop.permute.xlu0 %1481
        %1485 = vset.pattern.permute.xlu0 0
        %1486 = vperm.xlu0 %1485, %v1268
        %v1487 = vpop.permute.xlu0 %1486
        %1490 = vset.pattern.permute.xlu0 0
        %1491 = vperm.xlu0 %1490, %v1269
        %v1492 = vpop.permute.xlu0 %1491
        %1495 = vset.pattern.permute.xlu0 0
        %1496 = vperm.xlu0 %1495, %v1270
        %v1497 = vpop.permute.xlu0 %1496
        %1500 = vset.pattern.permute.xlu0 0
        %1501 = vperm.xlu0 %1500, %v1271
        %v1502 = vpop.permute.xlu0 %1501
        %1505 = vset.pattern.permute.xlu0 0
        %1506 = vperm.xlu0 %1505, %v1272
        %v1507 = vpop.permute.xlu0 %1506
        %1510 = vset.pattern.permute.xlu0 0
        %1511 = vperm.xlu0 %1510, %v1273
        %v1512 = vpop.permute.xlu0 %1511
        %1515 = vset.pattern.permute.xlu0 0
        %1516 = vperm.xlu0 %1515, %v1274
        %v1517 = vpop.permute.xlu0 %1516
        %1520 = vset.pattern.permute.xlu0 0
        %1521 = vperm.xlu0 %1520, %v1275
        %v1522 = vpop.permute.xlu0 %1521
        %1525 = vset.pattern.permute.xlu0 0
        %1526 = vperm.xlu0 %1525, %v1276
        %v1527 = vpop.permute.xlu0 %1526
        %1530 = vset.pattern.permute.xlu0 0
        %1531 = vperm.xlu0 %1530, %v1277
        %v1532 = vpop.permute.xlu0 %1531
        %1535 = vset.pattern.permute.xlu0 0
        %1536 = vperm.xlu0 %1535, %v1278
        %v1537 = vpop.permute.xlu0 %1536
        %1540 = vset.pattern.permute.xlu0 0
        %1541 = vperm.xlu0 %1540, %v1279
        %v1542 = vpop.permute.xlu0 %1541
        %1545 = vset.pattern.permute.xlu0 0
        %1546 = vperm.xlu0 %1545, %v1280
        %v1547 = vpop.permute.xlu0 %1546
        %1550 = vset.pattern.permute.xlu0 0
        %1551 = vperm.xlu0 %1550, %v1281
        %v1552 = vpop.permute.xlu0 %1551
        %1555 = vset.pattern.permute.xlu0 0
        %1556 = vperm.xlu0 %1555, %v1282
        %v1557 = vpop.permute.xlu0 %1556
        %1560 = vset.pattern.permute.xlu0 0
        %1561 = vperm.xlu0 %1560, %v1283
        %v1562 = vpop.permute.xlu0 %1561
        %1565 = vset.pattern.permute.xlu0 0
        %1566 = vperm.xlu0 %1565, %v1284
        %v1567 = vpop.permute.xlu0 %1566
        %1570 = vset.pattern.permute.xlu0 0
        %1571 = vperm.xlu0 %1570, %v1285
        %v1572 = vpop.permute.xlu0 %1571
        %1575 = vset.pattern.permute.xlu0 0
        %1576 = vperm.xlu0 %1575, %v1286
        %v1577 = vpop.permute.xlu0 %1576
        %1580 = vset.pattern.permute.xlu0 0
        %1581 = vperm.xlu0 %1580, %v1287
        %v1582 = vpop.permute.xlu0 %1581
        %1585 = vset.pattern.permute.xlu0 0
        %1586 = vperm.xlu0 %1585, %v1288
        %v1587 = vpop.permute.xlu0 %1586
        %1590 = vset.pattern.permute.xlu0 0
        %1591 = vperm.xlu0 %1590, %v1289
        %v1592 = vpop.permute.xlu0 %1591
        %1595 = vset.pattern.permute.xlu0 0
        %1596 = vperm.xlu0 %1595, %v1290
        %v1597 = vpop.permute.xlu0 %1596
        %1600 = vset.pattern.permute.xlu0 0
        %1601 = vperm.xlu0 %1600, %v1291
        %v1602 = vpop.permute.xlu0 %1601
        %1605 = vset.pattern.permute.xlu0 0
        %1606 = vperm.xlu0 %1605, %v1292
        %v1607 = vpop.permute.xlu0 %1606
        %1610 = vset.pattern.permute.xlu0 0
        %1611 = vperm.xlu0 %1610, %v1293
        %v1612 = vpop.permute.xlu0 %1611
        %1615 = vset.pattern.permute.xlu0 0
        %1616 = vperm.xlu0 %1615, %v1294
        %v1617 = vpop.permute.xlu0 %1616
        %1620 = vset.pattern.permute.xlu0 0
        %1621 = vperm.xlu0 %1620, %v1295
        %v1622 = vpop.permute.xlu0 %1621
        %1625 = vset.pattern.permute.xlu0 0
        %1626 = vperm.xlu0 %1625, %v1296
        %v1627 = vpop.permute.xlu0 %1626
        %1630 = vset.pattern.permute.xlu0 0
        %1631 = vperm.xlu0 %1630, %v1297
        %v1632 = vpop.permute.xlu0 %1631
        %1635 = vset.pattern.permute.xlu0 0
        %1636 = vperm.xlu0 %1635, %v1298
        %v1637 = vpop.permute.xlu0 %1636
        %1640 = vset.pattern.permute.xlu0 0
        %1641 = vperm.xlu0 %1640, %v1299
        %v1642 = vpop.permute.xlu0 %1641
        %1645 = vset.pattern.permute.xlu0 0
        %1646 = vperm.xlu0 %1645, %v1300
        %v1647 = vpop.permute.xlu0 %1646
        %1650 = vset.pattern.permute.xlu0 0
        %1651 = vperm.xlu0 %1650, %v1301
        %v1652 = vpop.permute.xlu0 %1651
        %1655 = vset.pattern.permute.xlu0 0
        %1656 = vperm.xlu0 %1655, %v1302
        %v1657 = vpop.permute.xlu0 %1656
        %1660 = vset.pattern.permute.xlu0 0
        %1661 = vperm.xlu0 %1660, %v1303
        %v1662 = vpop.permute.xlu0 %1661
        %1665 = vset.pattern.permute.xlu0 0
        %1666 = vperm.xlu0 %1665, %v1304
        %v1667 = vpop.permute.xlu0 %1666
        %1670 = vset.pattern.permute.xlu0 0
        %1671 = vperm.xlu0 %1670, %v1305
        %v1672 = vpop.permute.xlu0 %1671
        %1675 = vset.pattern.permute.xlu0 0
        %1676 = vperm.xlu0 %1675, %v1306
        %v1677 = vpop.permute.xlu0 %1676
        %1680 = vset.pattern.permute.xlu0 0
        %1681 = vperm.xlu0 %1680, %v1307
        %v1682 = vpop.permute.xlu0 %1681
        %1685 = vset.pattern.permute.xlu0 0
        %1686 = vperm.xlu0 %1685, %v1308
        %v1687 = vpop.permute.xlu0 %1686
        %1690 = vset.pattern.permute.xlu0 0
        %1691 = vperm.xlu0 %1690, %v1309
        %v1692 = vpop.permute.xlu0 %1691
        %1695 = vset.pattern.permute.xlu0 0
        %1696 = vperm.xlu0 %1695, %v1310
        %v1697 = vpop.permute.xlu0 %1696
        %1700 = vset.pattern.permute.xlu0 0
        %1701 = vperm.xlu0 %1700, %v1311
        %v1702 = vpop.permute.xlu0 %1701
        %1705 = vset.pattern.permute.xlu0 0
        %1706 = vperm.xlu0 %1705, %v1312
        %v1707 = vpop.permute.xlu0 %1706
        %1710 = vset.pattern.permute.xlu0 0
        %1711 = vperm.xlu0 %1710, %v1313
        %v1712 = vpop.permute.xlu0 %1711
        %1715 = vset.pattern.permute.xlu0 0
        %1716 = vperm.xlu0 %1715, %v1314
        %v1717 = vpop.permute.xlu0 %1716
        %1720 = vset.pattern.permute.xlu0 0
        %1721 = vperm.xlu0 %1720, %v1315
        %v1722 = vpop.permute.xlu0 %1721
        %1725 = vset.pattern.permute.xlu0 0
        %1726 = vperm.xlu0 %1725, %v1316
        %v1727 = vpop.permute.xlu0 %1726
        %1730 = vset.pattern.permute.xlu0 0
        %1731 = vperm.xlu0 %1730, %v1317
        %v1732 = vpop.permute.xlu0 %1731
        %1735 = vset.pattern.permute.xlu0 0
        %1736 = vperm.xlu0 %1735, %v1318
        %v1737 = vpop.permute.xlu0 %1736
        %1740 = vset.pattern.permute.xlu0 0
        %1741 = vperm.xlu0 %1740, %v1319
        %v1742 = vpop.permute.xlu0 %1741
        %1745 = vset.pattern.permute.xlu0 0
        %1746 = vperm.xlu0 %1745, %v1320
        %v1747 = vpop.permute.xlu0 %1746
        %1750 = vset.pattern.permute.xlu0 0
        %1751 = vperm.xlu0 %1750, %v1321
        %v1752 = vpop.permute.xlu0 %1751
        %1755 = vset.pattern.permute.xlu0 0
        %1756 = vperm.xlu0 %1755, %v1322
        %v1757 = vpop.permute.xlu0 %1756
        %1760 = vset.pattern.permute.xlu0 0
        %1761 = vperm.xlu0 %1760, %v1323
        %v1762 = vpop.permute.xlu0 %1761
        %1765 = vset.pattern.permute.xlu0 0
        %1766 = vperm.xlu0 %1765, %v1324
        %v1767 = vpop.permute.xlu0 %1766
        %1770 = vset.pattern.permute.xlu0 0
        %1771 = vperm.xlu0 %1770, %v1325
        %v1772 = vpop.permute.xlu0 %1771
        %v1774 = vadd.f32 %v1326, %v1457
        %v1775 = vadd.f32 %v1327, %v1457
        %v1776 = vadd.f32 %v1328, %v1462
        %v1777 = vadd.f32 %v1329, %v1462
        %v1778 = vadd.f32 %v1330, %v1467
        %v1779 = vadd.f32 %v1331, %v1467
        %v1780 = vadd.f32 %v1332, %v1472
        %v1781 = vadd.f32 %v1333, %v1472
        %v1782 = vadd.f32 %v1334, %v1477
        %v1783 = vadd.f32 %v1335, %v1477
        %v1784 = vadd.f32 %v1336, %v1482
        %v1785 = vadd.f32 %v1337, %v1482
        %v1786 = vadd.f32 %v1338, %v1487
        %v1787 = vadd.f32 %v1339, %v1487
        %v1788 = vadd.f32 %v1340, %v1492
        %v1789 = vadd.f32 %v1341, %v1492
        %v1790 = vadd.f32 %v1342, %v1497
        %v1791 = vadd.f32 %v1343, %v1497
        %v1792 = vadd.f32 %v1344, %v1502
        %v1793 = vadd.f32 %v1345, %v1502
        %v1794 = vadd.f32 %v1346, %v1507
        %v1795 = vadd.f32 %v1347, %v1507
        %v1796 = vadd.f32 %v1348, %v1512
        %v1797 = vadd.f32 %v1349, %v1512
        %v1798 = vadd.f32 %v1350, %v1517
        %v1799 = vadd.f32 %v1351, %v1517
        %v1800 = vadd.f32 %v1352, %v1522
        %v1801 = vadd.f32 %v1353, %v1522
        %v1802 = vadd.f32 %v1354, %v1527
        %v1803 = vadd.f32 %v1355, %v1527
        %v1804 = vadd.f32 %v1356, %v1532
        %v1805 = vadd.f32 %v1357, %v1532
        %v1806 = vadd.f32 %v1358, %v1537
        %v1807 = vadd.f32 %v1359, %v1537
        %v1808 = vadd.f32 %v1360, %v1542
        %v1809 = vadd.f32 %v1361, %v1542
        %v1810 = vadd.f32 %v1362, %v1547
        %v1811 = vadd.f32 %v1363, %v1547
        %v1812 = vadd.f32 %v1364, %v1552
        %v1813 = vadd.f32 %v1365, %v1552
        %v1814 = vadd.f32 %v1366, %v1557
        %v1815 = vadd.f32 %v1367, %v1557
        %v1816 = vadd.f32 %v1368, %v1562
        %v1817 = vadd.f32 %v1369, %v1562
        %v1818 = vadd.f32 %v1370, %v1567
        %v1819 = vadd.f32 %v1371, %v1567
        %v1820 = vadd.f32 %v1372, %v1572
        %v1821 = vadd.f32 %v1373, %v1572
        %v1822 = vadd.f32 %v1374, %v1577
        %v1823 = vadd.f32 %v1375, %v1577
        %v1824 = vadd.f32 %v1376, %v1582
        %v1825 = vadd.f32 %v1377, %v1582
        %v1826 = vadd.f32 %v1378, %v1587
        %v1827 = vadd.f32 %v1379, %v1587
        %v1828 = vadd.f32 %v1380, %v1592
        %v1829 = vadd.f32 %v1381, %v1592
        %v1830 = vadd.f32 %v1382, %v1597
        %v1831 = vadd.f32 %v1383, %v1597
        %v1832 = vadd.f32 %v1384, %v1602
        %v1833 = vadd.f32 %v1385, %v1602
        %v1834 = vadd.f32 %v1386, %v1607
        %v1835 = vadd.f32 %v1387, %v1607
        %v1836 = vadd.f32 %v1388, %v1612
        %v1837 = vadd.f32 %v1389, %v1612
        %v1838 = vadd.f32 %v1390, %v1617
        %v1839 = vadd.f32 %v1391, %v1617
        %v1840 = vadd.f32 %v1392, %v1622
        %v1841 = vadd.f32 %v1393, %v1622
        %v1842 = vadd.f32 %v1394, %v1627
        %v1843 = vadd.f32 %v1395, %v1627
        %v1844 = vadd.f32 %v1396, %v1632
        %v1845 = vadd.f32 %v1397, %v1632
        %v1846 = vadd.f32 %v1398, %v1637
        %v1847 = vadd.f32 %v1399, %v1637
        %v1848 = vadd.f32 %v1400, %v1642
        %v1849 = vadd.f32 %v1401, %v1642
        %v1850 = vadd.f32 %v1402, %v1647
        %v1851 = vadd.f32 %v1403, %v1647
        %v1852 = vadd.f32 %v1404, %v1652
        %v1853 = vadd.f32 %v1405, %v1652
        %v1854 = vadd.f32 %v1406, %v1657
        %v1855 = vadd.f32 %v1407, %v1657
        %v1856 = vadd.f32 %v1408, %v1662
        %v1857 = vadd.f32 %v1409, %v1662
        %v1858 = vadd.f32 %v1410, %v1667
        %v1859 = vadd.f32 %v1411, %v1667
        %v1860 = vadd.f32 %v1412, %v1672
        %v1861 = vadd.f32 %v1413, %v1672
        %v1862 = vadd.f32 %v1414, %v1677
        %v1863 = vadd.f32 %v1415, %v1677
        %v1864 = vadd.f32 %v1416, %v1682
        %v1865 = vadd.f32 %v1417, %v1682
        %v1866 = vadd.f32 %v1418, %v1687
        %v1867 = vadd.f32 %v1419, %v1687
        %v1868 = vadd.f32 %v1420, %v1692
        %v1869 = vadd.f32 %v1421, %v1692
        %v1870 = vadd.f32 %v1422, %v1697
        %v1871 = vadd.f32 %v1423, %v1697
        %v1872 = vadd.f32 %v1424, %v1702
        %v1873 = vadd.f32 %v1425, %v1702
        %v1874 = vadd.f32 %v1426, %v1707
        %v1875 = vadd.f32 %v1427, %v1707
        %v1876 = vadd.f32 %v1428, %v1712
        %v1877 = vadd.f32 %v1429, %v1712
        %v1878 = vadd.f32 %v1430, %v1717
        %v1879 = vadd.f32 %v1431, %v1717
        %v1880 = vadd.f32 %v1432, %v1722
        %v1881 = vadd.f32 %v1433, %v1722
        %v1882 = vadd.f32 %v1434, %v1727
        %v1883 = vadd.f32 %v1435, %v1727
        %v1884 = vadd.f32 %v1436, %v1732
        %v1885 = vadd.f32 %v1437, %v1732
        %v1886 = vadd.f32 %v1438, %v1737
        %v1887 = vadd.f32 %v1439, %v1737
        %v1888 = vadd.f32 %v1440, %v1742
        %v1889 = vadd.f32 %v1441, %v1742
        %v1890 = vadd.f32 %v1442, %v1747
        %v1891 = vadd.f32 %v1443, %v1747
        %v1892 = vadd.f32 %v1444, %v1752
        %v1893 = vadd.f32 %v1445, %v1752
        %v1894 = vadd.f32 %v1446, %v1757
        %v1895 = vadd.f32 %v1447, %v1757
        %v1896 = vadd.f32 %v1448, %v1762
        %v1897 = vadd.f32 %v1449, %v1762
        %v1898 = vadd.f32 %v1450, %v1767
        %v1899 = vadd.f32 %v1451, %v1767
        %v1900 = vadd.f32 %v1452, %v1772
        %v1901 = vadd.f32 %v1453, %v1772
        %1902 = vst [vmem:[%s243] sm:$0xff] %v1774
        %1903 = vst [vmem:[%s243 + $0x8] sm:$0xff] %v1775
        %1904 = vst [vmem:[%s243 + $0x10] sm:$0xff] %v1776
        %1905 = vst [vmem:[%s243 + $0x18] sm:$0xff] %v1777
        %1906 = vst [vmem:[%s243 + $0x20] sm:$0xff] %v1778
        %1907 = vst [vmem:[%s243 + $0x28] sm:$0xff] %v1779
        %1908 = vst [vmem:[%s243 + $0x30] sm:$0xff] %v1780
        %1909 = vst [vmem:[%s243 + $0x38] sm:$0xff] %v1781
        %1910 = vst [vmem:[%s243 + $0x40] sm:$0xff] %v1782
        %1911 = vst [vmem:[%s243 + $0x48] sm:$0xff] %v1783
        %1912 = vst [vmem:[%s243 + $0x50] sm:$0xff] %v1784
        %1913 = vst [vmem:[%s243 + $0x58] sm:$0xff] %v1785
        %1914 = vst [vmem:[%s243 + $0x60] sm:$0xff] %v1786
        %1915 = vst [vmem:[%s243 + $0x68] sm:$0xff] %v1787
        %1916 = vst [vmem:[%s243 + $0x70] sm:$0xff] %v1788
        %1917 = vst [vmem:[%s243 + $0x78] sm:$0xff] %v1789
        %1918 = vst [vmem:[%s243 + $0x80] sm:$0xff] %v1790
        %1919 = vst [vmem:[%s243 + $0x88] sm:$0xff] %v1791
        %1920 = vst [vmem:[%s243 + $0x90] sm:$0xff] %v1792
        %1921 = vst [vmem:[%s243 + $0x98] sm:$0xff] %v1793
        %1922 = vst [vmem:[%s243 + $0xa0] sm:$0xff] %v1794
        %1923 = vst [vmem:[%s243 + $0xa8] sm:$0xff] %v1795
        %1924 = vst [vmem:[%s243 + $0xb0] sm:$0xff] %v1796
        %1925 = vst [vmem:[%s243 + $0xb8] sm:$0xff] %v1797
        %1926 = vst [vmem:[%s243 + $0xc0] sm:$0xff] %v1798
        %1927 = vst [vmem:[%s243 + $0xc8] sm:$0xff] %v1799
        %1928 = vst [vmem:[%s243 + $0xd0] sm:$0xff] %v1800
        %1929 = vst [vmem:[%s243 + $0xd8] sm:$0xff] %v1801
        %1930 = vst [vmem:[%s243 + $0xe0] sm:$0xff] %v1802
        %1931 = vst [vmem:[%s243 + $0xe8] sm:$0xff] %v1803
        %1932 = vst [vmem:[%s243 + $0xf0] sm:$0xff] %v1804
        %1933 = vst [vmem:[%s243 + $0xf8] sm:$0xff] %v1805
        %1934 = vst [vmem:[%s243 + $0x100] sm:$0xff] %v1806
        %1935 = vst [vmem:[%s243 + $0x108] sm:$0xff] %v1807
        %1936 = vst [vmem:[%s243 + $0x110] sm:$0xff] %v1808
        %1937 = vst [vmem:[%s243 + $0x118] sm:$0xff] %v1809
        %1938 = vst [vmem:[%s243 + $0x120] sm:$0xff] %v1810
        %1939 = vst [vmem:[%s243 + $0x128] sm:$0xff] %v1811
        %1940 = vst [vmem:[%s243 + $0x130] sm:$0xff] %v1812
        %1941 = vst [vmem:[%s243 + $0x138] sm:$0xff] %v1813
        %1942 = vst [vmem:[%s243 + $0x140] sm:$0xff] %v1814
        %1943 = vst [vmem:[%s243 + $0x148] sm:$0xff] %v1815
        %1944 = vst [vmem:[%s243 + $0x150] sm:$0xff] %v1816
        %1945 = vst [vmem:[%s243 + $0x158] sm:$0xff] %v1817
        %1946 = vst [vmem:[%s243 + $0x160] sm:$0xff] %v1818
        %1947 = vst [vmem:[%s243 + $0x168] sm:$0xff] %v1819
        %1948 = vst [vmem:[%s243 + $0x170] sm:$0xff] %v1820
        %1949 = vst [vmem:[%s243 + $0x178] sm:$0xff] %v1821
        %1950 = vst [vmem:[%s243 + $0x180] sm:$0xff] %v1822
        %1951 = vst [vmem:[%s243 + $0x188] sm:$0xff] %v1823
        %1952 = vst [vmem:[%s243 + $0x190] sm:$0xff] %v1824
        %1953 = vst [vmem:[%s243 + $0x198] sm:$0xff] %v1825
        %1954 = vst [vmem:[%s243 + $0x1a0] sm:$0xff] %v1826
        %1955 = vst [vmem:[%s243 + $0x1a8] sm:$0xff] %v1827
        %1956 = vst [vmem:[%s243 + $0x1b0] sm:$0xff] %v1828
        %1957 = vst [vmem:[%s243 + $0x1b8] sm:$0xff] %v1829
        %1958 = vst [vmem:[%s243 + $0x1c0] sm:$0xff] %v1830
        %1959 = vst [vmem:[%s243 + $0x1c8] sm:$0xff] %v1831
        %1960 = vst [vmem:[%s243 + $0x1d0] sm:$0xff] %v1832
        %1961 = vst [vmem:[%s243 + $0x1d8] sm:$0xff] %v1833
        %1962 = vst [vmem:[%s243 + $0x1e0] sm:$0xff] %v1834
        %1963 = vst [vmem:[%s243 + $0x1e8] sm:$0xff] %v1835
        %1964 = vst [vmem:[%s243 + $0x1f0] sm:$0xff] %v1836
        %1965 = vst [vmem:[%s243 + $0x1f8] sm:$0xff] %v1837
        %1966 = vst [vmem:[%s243 + $0x200] sm:$0xff] %v1838
        %1967 = vst [vmem:[%s243 + $0x208] sm:$0xff] %v1839
        %1968 = vst [vmem:[%s243 + $0x210] sm:$0xff] %v1840
        %1969 = vst [vmem:[%s243 + $0x218] sm:$0xff] %v1841
        %1970 = vst [vmem:[%s243 + $0x220] sm:$0xff] %v1842
        %1971 = vst [vmem:[%s243 + $0x228] sm:$0xff] %v1843
        %1972 = vst [vmem:[%s243 + $0x230] sm:$0xff] %v1844
        %1973 = vst [vmem:[%s243 + $0x238] sm:$0xff] %v1845
        %1974 = vst [vmem:[%s243 + $0x240] sm:$0xff] %v1846
        %1975 = vst [vmem:[%s243 + $0x248] sm:$0xff] %v1847
        %1976 = vst [vmem:[%s243 + $0x250] sm:$0xff] %v1848
        %1977 = vst [vmem:[%s243 + $0x258] sm:$0xff] %v1849
        %1978 = vst [vmem:[%s243 + $0x260] sm:$0xff] %v1850
        %1979 = vst [vmem:[%s243 + $0x268] sm:$0xff] %v1851
        %1980 = vst [vmem:[%s243 + $0x270] sm:$0xff] %v1852
        %1981 = vst [vmem:[%s243 + $0x278] sm:$0xff] %v1853
        %1982 = vst [vmem:[%s243 + $0x280] sm:$0xff] %v1854
        %1983 = vst [vmem:[%s243 + $0x288] sm:$0xff] %v1855
        %1984 = vst [vmem:[%s243 + $0x290] sm:$0xff] %v1856
        %1985 = vst [vmem:[%s243 + $0x298] sm:$0xff] %v1857
        %1986 = vst [vmem:[%s243 + $0x2a0] sm:$0xff] %v1858
        %1987 = vst [vmem:[%s243 + $0x2a8] sm:$0xff] %v1859
        %1988 = vst [vmem:[%s243 + $0x2b0] sm:$0xff] %v1860
        %1989 = vst [vmem:[%s243 + $0x2b8] sm:$0xff] %v1861
        %1990 = vst [vmem:[%s243 + $0x2c0] sm:$0xff] %v1862
        %1991 = vst [vmem:[%s243 + $0x2c8] sm:$0xff] %v1863
        %1992 = vst [vmem:[%s243 + $0x2d0] sm:$0xff] %v1864
        %1993 = vst [vmem:[%s243 + $0x2d8] sm:$0xff] %v1865
        %1994 = vst [vmem:[%s243 + $0x2e0] sm:$0xff] %v1866
        %1995 = vst [vmem:[%s243 + $0x2e8] sm:$0xff] %v1867
        %1996 = vst [vmem:[%s243 + $0x2f0] sm:$0xff] %v1868
        %1997 = vst [vmem:[%s243 + $0x2f8] sm:$0xff] %v1869
        %1998 = vst [vmem:[%s243 + $0x300] sm:$0xff] %v1870
        %1999 = vst [vmem:[%s243 + $0x308] sm:$0xff] %v1871
        %2000 = vst [vmem:[%s243 + $0x310] sm:$0xff] %v1872
        %2001 = vst [vmem:[%s243 + $0x318] sm:$0xff] %v1873
        %2002 = vst [vmem:[%s243 + $0x320] sm:$0xff] %v1874
        %2003 = vst [vmem:[%s243 + $0x328] sm:$0xff] %v1875
        %2004 = vst [vmem:[%s243 + $0x330] sm:$0xff] %v1876
        %2005 = vst [vmem:[%s243 + $0x338] sm:$0xff] %v1877
        %2006 = vst [vmem:[%s243 + $0x340] sm:$0xff] %v1878
        %2007 = vst [vmem:[%s243 + $0x348] sm:$0xff] %v1879
        %2008 = vst [vmem:[%s243 + $0x350] sm:$0xff] %v1880
        %2009 = vst [vmem:[%s243 + $0x358] sm:$0xff] %v1881
        %2010 = vst [vmem:[%s243 + $0x360] sm:$0xff] %v1882
        %2011 = vst [vmem:[%s243 + $0x368] sm:$0xff] %v1883
        %2012 = vst [vmem:[%s243 + $0x370] sm:$0xff] %v1884
        %2013 = vst [vmem:[%s243 + $0x378] sm:$0xff] %v1885
        %2014 = vst [vmem:[%s243 + $0x380] sm:$0xff] %v1886
        %2015 = vst [vmem:[%s243 + $0x388] sm:$0xff] %v1887
        %2016 = vst [vmem:[%s243 + $0x390] sm:$0xff] %v1888
        %2017 = vst [vmem:[%s243 + $0x398] sm:$0xff] %v1889
        %2018 = vst [vmem:[%s243 + $0x3a0] sm:$0xff] %v1890
        %2019 = vst [vmem:[%s243 + $0x3a8] sm:$0xff] %v1891
        %2020 = vst [vmem:[%s243 + $0x3b0] sm:$0xff] %v1892
        %2021 = vst [vmem:[%s243 + $0x3b8] sm:$0xff] %v1893
        %2022 = vst [vmem:[%s243 + $0x3c0] sm:$0xff] %v1894
        %2023 = vst [vmem:[%s243 + $0x3c8] sm:$0xff] %v1895
        %2024 = vst [vmem:[%s243 + $0x3d0] sm:$0xff] %v1896
        %2025 = vst [vmem:[%s243 + $0x3d8] sm:$0xff] %v1897
        %2026 = vst [vmem:[%s243 + $0x3e0] sm:$0xff] %v1898
        %2027 = vst [vmem:[%s243 + $0x3e8] sm:$0xff] %v1899
        %2028 = vst [vmem:[%s243 + $0x3f0] sm:$0xff] %v1900
        %2029 = vst [vmem:[%s243 + $0x3f8] sm:$0xff] %v1901
        %s2030 = sand.u32 %s140, 1
        %s2031 = scalar_lea.sflag [#allocation5], %s2030
        %s2032 = sand.u32 %s140, 1
        %s2033 = smul.addr %s2032, 1024
        %s2034 = scalar_lea.vmem [#allocation6], %s2033
        // Predicated region
        $region49: #{tpu_custom_call.1} parent=39 // pred_check
          %p2035 = pneg %p150
        $region50: #{tpu_custom_call.1} parent=39 // pred_check_branch
          %2037 = sbr.rel (%p2035) target = $region52
        $region51: #{tpu_custom_call.1} parent=39 // pred_region
          %s2038 = smul.u32 64, %s22
          %s2040 = ssub.s32 16384, 16384
          %2041 = vsyncadd %s2031, %s2040
          %s2042 = smul.addr %s2038, 2
          %s2043 = smul.addr %s2042, 128
          %s2044 = scalar_lea.hbm %s5, %s2043
          %s2045 = sshll.u32 %s2034, 4
          %s2046 = int_to_ptr.vmem [resolvable:$true] %s2045
          %2051 = dma.vmem_to_hbm [thread:$0]  %s2046, 16384, %s2044, %s2031, 256, 256, 16
        $region52: #{tpu_custom_call.1} parent=39 // pred_fallthru
          _
      $region40: #{tpu_custom_call.1} parent=5 // pred_fallthru
        _
      %p2052 = scmp.le.s32.totalorder 2, %s17
      // Predicated region
      $region53: #{tpu_custom_call.1} parent=5 // pred_check
        %p2053 = pneg %p2052
      $region54: #{tpu_custom_call.1} parent=5 // pred_check_branch
        %2055 = sbr.rel (%p2053) target = $region56
      $region55: #{tpu_custom_call.1} parent=5 // pred_region
        %s2056 = ssub.s32 %s17, 2
        // Predicated region
        $region57: #{tpu_custom_call.1} parent=55 // pred_check
          %p2057 = pneg %p156
        $region58: #{tpu_custom_call.1} parent=55 // pred_check_branch
          %2059 = sbr.rel (%p2057) target = $region60
        $region59: #{tpu_custom_call.1} parent=55 // pred_region
          %s2060 = sand.u32 %s141, 1
          %s2061 = scalar_lea.sflag [#allocation5], %s2060
          %s2062 = sand.u32 %s141, 1
          %s2063 = smul.addr %s2062, 1024
          %s2064 = scalar_lea.vmem [#allocation6], %s2063
          %2065 = dma.done %s2061, 16384
        $region60: #{tpu_custom_call.1} parent=55 // pred_fallthru
          _
      $region56: #{tpu_custom_call.1} parent=5 // pred_fallthru
        _
    $region6: #{tpu_custom_call.1} parent=1 // loop_footer
      %s21 = sadd.s32 1, %s17
    $region7: #{tpu_custom_call.1} parent=1 // loop_footer_branch
      %16 = sbr.rel target = $region3
    $region8: #{tpu_custom_call.1} parent=1 // loop_exit
      _
    %2066 = vsyncpa [#allocation4], 1
    %s2067 = scalar_lea.sflag [#allocation4], 1
    %2068 = vsyncpa %s2067, 1
    %2069 = vsyncpa [#allocation5], 1
    %s2070 = scalar_lea.sflag [#allocation5], 1
    %2071 = vsyncpa %s2070, 1

</llo_original>
